<compile_context>
chip_gen: v7x
topology: tpu7x:2x2x1
jax: 0.10.0
libtpu: 0.0.40
codegen_flags: <defaults>
</compile_context>

<pallas_src>
import jax
import jax.numpy as jnp
from jax.experimental import pallas as pl
from jax.experimental.pallas import tpu as pltpu  # noqa: F401  (kept for TPU-specific extensions)

# ---------------- problem sizes (small, consistent with the module) ----------
B = 128          # batch of (user, item) training samples per pallas_call
E = 32           # args.embedding_dim
I_ATTR = 2       # args.i_attr
D = I_ATTR * E   # item / retrieve feature width = 64
NUM_USERS = 16
NUM_ITEMS = 32

MATMUL_DTYPE = jnp.bfloat16   # MXU operand dtype (f32 accumulation everywhere)


def adaptor_kernel(user_ref, item_ref, utab_ref, itab_ref,
                   his_ref, rct_ref,
                   w_enc_ref, b_enc_ref,
                   w_ret_h_ref, w_ret_r_ref, b_ret_ref,
                   w_itm_ref, b_itm_ref,
                   w_rec_u_ref, w_rec_i_ref, w_rec_r_ref, b_rec_ref,
                   pred_ref, loss_ref):
    f32 = jnp.float32
    mm = MATMUL_DTYPE

    # ---- embedding lookups fused in-kernel as one-hot MXU matmuls -----------
    u_idx = user_ref[...]                                   # (B, 1) int32
    i_idx = item_ref[...]                                   # (B, 1) int32
    iota_u = jax.lax.broadcasted_iota(jnp.int32, (B, NUM_USERS), 1)
    iota_i = jax.lax.broadcasted_iota(jnp.int32, (B, NUM_ITEMS), 1)
    oh_u = jnp.where(iota_u == u_idx, 1.0, 0.0).astype(mm)  # (B, NUM_USERS)
    oh_i = jnp.where(iota_i == i_idx, 1.0, 0.0).astype(mm)  # (B, NUM_ITEMS)
    eu = jnp.dot(oh_u, utab_ref[...].astype(mm), preferred_element_type=f32)  # (B, E)
    ei = jnp.dot(oh_i, itab_ref[...].astype(mm), preferred_element_type=f32)  # (B, D)

    # ---- fused encoders: ONE (3B, D) @ (D, 2D) MXU dot ----------------------
    # X rows:   [his; rct; ei]        W cols: [w_his | w_rct]
    x = jnp.concatenate([his_ref[...], rct_ref[...], ei], axis=0)       # (3B, D)
    y = jnp.dot(x.astype(mm), w_enc_ref[...].astype(mm),
                preferred_element_type=f32) + b_enc_ref[...]            # (3B, 2D)
    # Tile-aligned, full-lane row blocks (cheap slices; no lane masking):
    y_his = y[0 * B:1 * B, :]   # [ his_r          | garbage        ]
    y_rct = y[1 * B:2 * B, :]   # [ garbage        | rct_r          ]
    y_ei  = y[2 * B:3 * B, :]   # [ eih            | eir            ] == cat(eih, eir)

    # ---- retrieve_aggregator: zero-padded split weights (built in wrapper)
    # kill the garbage half of each row block, so no lane slicing is needed.
    enh_ret = (jnp.dot(y_his.astype(mm), w_ret_h_ref[...].astype(mm),
                       preferred_element_type=f32)
               + jnp.dot(y_rct.astype(mm), w_ret_r_ref[...].astype(mm),
                         preferred_element_type=f32)
               + b_ret_ref[...])                                        # (B, D)

    # ---- item_aggregator: cat(eih, eir) is already lane-contiguous ----------
    enh_itm = (jnp.dot(y_ei.astype(mm), w_itm_ref[...].astype(mm),
                       preferred_element_type=f32)
               + b_itm_ref[...])                                        # (B, E)

    # ---- rec_model: N=1 output -> VPU broadcast-mul + lane reduce (no MXU) --
    logits = (jnp.sum(eu * w_rec_u_ref[...], axis=-1, keepdims=True)
              + jnp.sum(enh_itm * w_rec_i_ref[...], axis=-1, keepdims=True)
              + jnp.sum(enh_ret * w_rec_r_ref[...], axis=-1, keepdims=True)
              + b_rec_ref[...])                                         # (B, 1)
    pred = jax.nn.sigmoid(logits)

    # (B,1) output -> masked single-lane stores; negligible at this size.
    pred_ref[...] = pred
    # MSE against ones (reduction='mean'), as in the module's forward.
    loss_ref[...] = jnp.mean((pred - 1.0) ** 2, keepdims=True)          # (1, 1)


@jax.jit
def adaptor_forward(user, item, user_table, item_table, his, rct, params):
    """Fused AdaptorRecommender.forward hot path in one Pallas call.

    All weight packing below is trace-time / XLA-side and free per step; it
    exists so the kernel never slices a loaded weight value.
    """
    f32 = jnp.float32
    zeros_dd = jnp.zeros((D, D), f32)
    w_enc = jnp.concatenate([params["w_his"], params["w_rct"]], axis=1)      # (D, 2D)
    b_enc = jnp.concatenate([params["b_his"], params["b_rct"]], axis=1)      # (1, 2D)
    w_ret_h = jnp.concatenate([params["w_ret"][:D, :], zeros_dd], axis=0)    # (2D, D)
    w_ret_r = jnp.concatenate([zeros_dd, params["w_ret"][D:, :]], axis=0)    # (2D, D)
    w_rec_u = params["w_rec"][:E, 0].reshape(1, E)                           # (1, E)
    w_rec_i = params["w_rec"][E:2 * E, 0].reshape(1, E)                      # (1, E)
    w_rec_r = params["w_rec"][2 * E:, 0].reshape(1, D)                       # (1, D)

    out_shape = (
        jax.ShapeDtypeStruct((B, 1), f32),   # pos_pred (returned for verification)
        jax.ShapeDtypeStruct((1, 1), f32),   # bpr (mse) loss
    )
    # No grid: every operand is tiny and loaded whole into VMEM
    # (default BlockSpec = full array resident in VMEM).
    pred, loss = pl.pallas_call(
        adaptor_kernel,
        out_shape=out_shape,
    )(user.reshape(B, 1).astype(jnp.int32),
      item.reshape(B, 1).astype(jnp.int32),
      user_table, item_table, his, rct,
      w_enc, b_enc,
      w_ret_h, w_ret_r, params["b_ret"],
      params["w_itm"], params["b_itm"],
      w_rec_u, w_rec_i, w_rec_r, params["b_rec"])
    return pred, loss


def mirror_reference(user, item, utab, itab, his, rct, p):
    """Pure-JAX mirror of the kernel's exact op/dtype sequence (bf16 MXU
    operands, f32 accumulation) — tight numerical check."""
    f32, mm = jnp.float32, MATMUL_DTYPE
    oh_u = jnp.where(jnp.arange(NUM_USERS)[None, :] == user[:, None], 1.0, 0.0).astype(mm)
    oh_i = jnp.where(jnp.arange(NUM_ITEMS)[None, :] == item[:, None], 1.0, 0.0).astype(mm)
    eu = jnp.dot(oh_u, utab.astype(mm), preferred_element_type=f32)
    ei = jnp.dot(oh_i, itab.astype(mm), preferred_element_type=f32)

    w_enc = jnp.concatenate([p["w_his"], p["w_rct"]], axis=1)
    b_enc = jnp.concatenate([p["b_his"], p["b_rct"]], axis=1)
    x = jnp.concatenate([his, rct, ei], axis=0)
    y = jnp.dot(x.astype(mm), w_enc.astype(mm), preferred_element_type=f32) + b_enc

    zdd = jnp.zeros((D, D), f32)
    w_ret_h = jnp.concatenate([p["w_ret"][:D, :], zdd], axis=0)
    w_ret_r = jnp.concatenate([zdd, p["w_ret"][D:, :]], axis=0)
    enh_ret = (jnp.dot(y[:B].astype(mm), w_ret_h.astype(mm), preferred_element_type=f32)
               + jnp.dot(y[B:2 * B].astype(mm), w_ret_r.astype(mm), preferred_element_type=f32)
               + p["b_ret"])
    enh_itm = (jnp.dot(y[2 * B:].astype(mm), p["w_itm"].astype(mm),
                       preferred_element_type=f32) + p["b_itm"])

    logits = (jnp.sum(eu * p["w_rec"][:E, 0][None, :], axis=-1, keepdims=True)
              + jnp.sum(enh_itm * p["w_rec"][E:2 * E, 0][None, :], axis=-1, keepdims=True)
              + jnp.sum(enh_ret * p["w_rec"][2 * E:, 0][None, :], axis=-1, keepdims=True)
              + p["b_rec"])
    pred = jax.nn.sigmoid(logits)
    return pred, jnp.mean((pred - 1.0) ** 2, keepdims=True)


def reference_forward_f32(user, item, utab, itab, his, rct, p):
    """Straight f32 transcription of the PyTorch forward (module semantics)."""
    eu = jnp.take(utab, user, axis=0)
    ei = jnp.take(itab, item, axis=0)
    his_r = his @ p["w_his"] + p["b_his"]
    rct_r = rct @ p["w_rct"] + p["b_rct"]
    eih = ei @ p["w_his"] + p["b_his"]
    eir = ei @ p["w_rct"] + p["b_rct"]
    enh_ret = jnp.concatenate([his_r, rct_r], -1) @ p["w_ret"] + p["b_ret"]
    enh_itm = jnp.concatenate([eih, eir], -1) @ p["w_itm"] + p["b_itm"]
    logits = jnp.concatenate([eu, enh_itm, enh_ret], -1) @ p["w_rec"] + p["b_rec"]
    pred = jax.nn.sigmoid(logits)
    return pred, jnp.mean((pred - 1.0) ** 2, keepdims=True)


if __name__ == "__main__":
    key = jax.random.PRNGKey(0)
    ks = jax.random.split(key, 16)

    # deterministic synthetic parameters (shapes from __init__)
    user_table = jax.random.normal(ks[0], (NUM_USERS, E), jnp.float32) * 0.1
    item_table = jax.random.normal(ks[1], (NUM_ITEMS, D), jnp.float32) * 0.1
    params = {
        "w_his": jax.random.normal(ks[2], (D, D), jnp.float32) * 0.1,
        "b_his": jax.random.normal(ks[3], (1, D), jnp.float32) * 0.05,
        "w_rct": jax.random.normal(ks[4], (D, D), jnp.float32) * 0.1,
        "b_rct": jax.random.normal(ks[5], (1, D), jnp.float32) * 0.05,
        "w_ret": jax.random.normal(ks[6], (2 * D, D), jnp.float32) * 0.1,    # retrieve_aggregator
        "b_ret": jax.random.normal(ks[7], (1, D), jnp.float32) * 0.05,
        "w_itm": jax.random.normal(ks[8], (2 * D, E), jnp.float32) * 0.1,    # item_aggregator
        "b_itm": jax.random.normal(ks[9], (1, E), jnp.float32) * 0.05,
        "w_rec": jax.random.normal(ks[10], (2 * E + D, 1), jnp.float32) * 0.1,  # rec_model
        "b_rec": jax.random.normal(ks[11], (1, 1), jnp.float32) * 0.05,
    }

    # example inputs
    user = jax.random.randint(ks[12], (B,), 0, NUM_USERS)
    item = jax.random.randint(ks[13], (B,), 0, NUM_ITEMS)
    his_retrieve = jax.random.normal(ks[14], (B, D), jnp.float32)
    rct_retrieve = jax.random.normal(ks[15], (B, D), jnp.float32)

    pred, loss = adaptor_forward(user, item, user_table, item_table,
                                 his_retrieve, rct_retrieve, params)
    jax.block_until_ready((pred, loss))

    # Tight check against the exact-op mirror (same bf16/f32 dtype choices).
    m_pred, m_loss = mirror_reference(user, item, user_table, item_table,
                                      his_retrieve, rct_retrieve, params)
    assert jnp.allclose(pred, m_pred, atol=1e-4, rtol=1e-4), (
        "pred mismatch vs mirror:", float(jnp.max(jnp.abs(pred - m_pred))))
    assert jnp.allclose(loss, m_loss, atol=1e-4, rtol=1e-4), (
        "loss mismatch vs mirror:", float(jnp.max(jnp.abs(loss - m_loss))))

    # Loose check against the module-faithful f32 reference (bf16 MXU operands
    # introduce ~1e-3 level deviations; original module was f64 anyway).
    r_pred, r_loss = reference_forward_f32(user, item, user_table, item_table,
                                           his_retrieve, rct_retrieve, params)
    assert jnp.allclose(pred, r_pred, atol=5e-2), (
        "pred mismatch vs f32 ref:", float(jnp.max(jnp.abs(pred - r_pred))))
    assert jnp.allclose(loss, r_loss, atol=5e-2), (
        "loss mismatch vs f32 ref:", float(jnp.max(jnp.abs(loss - r_loss))))

    print("KERNEL_OK")
</pallas_src>

<mosaic_0001>
module attributes {stable_mosaic.version = 11 : i64} {
  func.func @adaptor_kernel(%arg0: memref<128x1xi32, #tpu.memory_space<vmem>>, %arg1: memref<128x1xi32, #tpu.memory_space<vmem>>, %arg2: memref<16x32xf32, #tpu.memory_space<vmem>>, %arg3: memref<32x64xf32, #tpu.memory_space<vmem>>, %arg4: memref<128x64xf32, #tpu.memory_space<vmem>>, %arg5: memref<128x64xf32, #tpu.memory_space<vmem>>, %arg6: memref<64x128xf32, #tpu.memory_space<vmem>>, %arg7: memref<1x128xf32, #tpu.memory_space<vmem>>, %arg8: memref<128x64xf32, #tpu.memory_space<vmem>>, %arg9: memref<128x64xf32, #tpu.memory_space<vmem>>, %arg10: memref<1x64xf32, #tpu.memory_space<vmem>>, %arg11: memref<128x32xf32, #tpu.memory_space<vmem>>, %arg12: memref<1x32xf32, #tpu.memory_space<vmem>>, %arg13: memref<1x32xf32, #tpu.memory_space<vmem>>, %arg14: memref<1x32xf32, #tpu.memory_space<vmem>>, %arg15: memref<1x64xf32, #tpu.memory_space<vmem>>, %arg16: memref<1x1xf32, #tpu.memory_space<vmem>>, %arg17: memref<128x1xf32, #tpu.memory_space<vmem>>, %arg18: memref<1x1xf32, #tpu.memory_space<vmem>>) attributes {dimension_semantics = [], scalar_prefetch = 0 : i64, scratch_operands = 0 : i64, tpu.core_type = #tpu.core_type<tc>} {
    %c0 = arith.constant 0 : index
    %c0_0 = arith.constant 0 : index
    %0 = vector.load %arg0[%c0, %c0_0] : memref<128x1xi32, #tpu.memory_space<vmem>>, vector<128x1xi32>
    %c0_1 = arith.constant 0 : index
    %c0_2 = arith.constant 0 : index
    %1 = vector.load %arg1[%c0_1, %c0_2] : memref<128x1xi32, #tpu.memory_space<vmem>>, vector<128x1xi32>
    %2 = tpu.iota {dimensions = array<i32: 1>} : vector<128x16xi32>
    %3 = tpu.iota {dimensions = array<i32: 1>} : vector<128x32xi32>
    %4 = vector.broadcast %0 : vector<128x1xi32> to vector<128x16xi32>
    %5 = arith.cmpi eq, %2, %4 : vector<128x16xi32>
    %cst = arith.constant 1.000000e+00 : f32
    %cst_3 = arith.constant 0.000000e+00 : f32
    %6 = vector.broadcast %cst : f32 to vector<128x16xf32>
    %7 = vector.broadcast %cst_3 : f32 to vector<128x16xf32>
    %8 = arith.select %5, %6, %7 : vector<128x16xi1>, vector<128x16xf32>
    %9 = arith.truncf %8 : vector<128x16xf32> to vector<128x16xbf16>
    %10 = vector.broadcast %1 : vector<128x1xi32> to vector<128x32xi32>
    %11 = arith.cmpi eq, %3, %10 : vector<128x32xi32>
    %cst_4 = arith.constant 1.000000e+00 : f32
    %cst_5 = arith.constant 0.000000e+00 : f32
    %12 = vector.broadcast %cst_4 : f32 to vector<128x32xf32>
    %13 = vector.broadcast %cst_5 : f32 to vector<128x32xf32>
    %14 = arith.select %11, %12, %13 : vector<128x32xi1>, vector<128x32xf32>
    %15 = arith.truncf %14 : vector<128x32xf32> to vector<128x32xbf16>
    %c0_6 = arith.constant 0 : index
    %c0_7 = arith.constant 0 : index
    %16 = vector.load %arg2[%c0_6, %c0_7] : memref<16x32xf32, #tpu.memory_space<vmem>>, vector<16x32xf32>
    %17 = arith.truncf %16 : vector<16x32xf32> to vector<16x32xbf16>
    %cst_8 = arith.constant dense<0.000000e+00> : vector<128x32xf32>
    %18 = tpu.matmul %9, %17, %cst_8 {dimension_numbers = #tpu.dot_dimension_numbers<[1], [0], [0], [1], [0, 0, 1, 1], [], []>} : vector<128x16xbf16>, vector<16x32xbf16>, vector<128x32xf32> -> vector<128x32xf32>
    %c0_9 = arith.constant 0 : index
    %c0_10 = arith.constant 0 : index
    %19 = vector.load %arg3[%c0_9, %c0_10] : memref<32x64xf32, #tpu.memory_space<vmem>>, vector<32x64xf32>
    %20 = arith.truncf %19 : vector<32x64xf32> to vector<32x64xbf16>
    %cst_11 = arith.constant dense<0.000000e+00> : vector<128x64xf32>
    %21 = tpu.matmul %15, %20, %cst_11 {dimension_numbers = #tpu.dot_dimension_numbers<[1], [0], [0], [1], [0, 0, 1, 1], [], []>} : vector<128x32xbf16>, vector<32x64xbf16>, vector<128x64xf32> -> vector<128x64xf32>
    %c0_12 = arith.constant 0 : index
    %c0_13 = arith.constant 0 : index
    %22 = vector.load %arg4[%c0_12, %c0_13] : memref<128x64xf32, #tpu.memory_space<vmem>>, vector<128x64xf32>
    %c0_14 = arith.constant 0 : index
    %c0_15 = arith.constant 0 : index
    %23 = vector.load %arg5[%c0_14, %c0_15] : memref<128x64xf32, #tpu.memory_space<vmem>>, vector<128x64xf32>
    %24 = tpu.concatenate %22, %23, %21 in 0 : vector<128x64xf32>, vector<128x64xf32>, vector<128x64xf32> -> vector<384x64xf32>
    %25 = arith.truncf %24 : vector<384x64xf32> to vector<384x64xbf16>
    %c0_16 = arith.constant 0 : index
    %c0_17 = arith.constant 0 : index
    %26 = vector.load %arg6[%c0_16, %c0_17] : memref<64x128xf32, #tpu.memory_space<vmem>>, vector<64x128xf32>
    %27 = arith.truncf %26 : vector<64x128xf32> to vector<64x128xbf16>
    %cst_18 = arith.constant dense<0.000000e+00> : vector<384x128xf32>
    %28 = tpu.matmul %25, %27, %cst_18 {dimension_numbers = #tpu.dot_dimension_numbers<[1], [0], [0], [1], [0, 0, 1, 1], [], []>} : vector<384x64xbf16>, vector<64x128xbf16>, vector<384x128xf32> -> vector<384x128xf32>
    %c0_19 = arith.constant 0 : index
    %c0_20 = arith.constant 0 : index
    %29 = vector.load %arg7[%c0_19, %c0_20] : memref<1x128xf32, #tpu.memory_space<vmem>>, vector<1x128xf32>
    %30 = vector.broadcast %29 : vector<1x128xf32> to vector<384x128xf32>
    %31 = arith.addf %28, %30 : vector<384x128xf32>
    %32 = vector.extract_strided_slice %31 {offsets = [0, 0], sizes = [128, 128], strides = [1, 1]} : vector<384x128xf32> to vector<128x128xf32>
    %33 = vector.extract_strided_slice %31 {offsets = [128, 0], sizes = [128, 128], strides = [1, 1]} : vector<384x128xf32> to vector<128x128xf32>
    %34 = vector.extract_strided_slice %31 {offsets = [256, 0], sizes = [128, 128], strides = [1, 1]} : vector<384x128xf32> to vector<128x128xf32>
    %35 = arith.truncf %32 : vector<128x128xf32> to vector<128x128xbf16>
    %c0_21 = arith.constant 0 : index
    %c0_22 = arith.constant 0 : index
    %36 = vector.load %arg8[%c0_21, %c0_22] : memref<128x64xf32, #tpu.memory_space<vmem>>, vector<128x64xf32>
    %37 = arith.truncf %36 : vector<128x64xf32> to vector<128x64xbf16>
    %cst_23 = arith.constant dense<0.000000e+00> : vector<128x64xf32>
    %38 = tpu.matmul %35, %37, %cst_23 {dimension_numbers = #tpu.dot_dimension_numbers<[1], [0], [0], [1], [0, 0, 1, 1], [], []>} : vector<128x128xbf16>, vector<128x64xbf16>, vector<128x64xf32> -> vector<128x64xf32>
    %39 = arith.truncf %33 : vector<128x128xf32> to vector<128x128xbf16>
    %c0_24 = arith.constant 0 : index
    %c0_25 = arith.constant 0 : index
    %40 = vector.load %arg9[%c0_24, %c0_25] : memref<128x64xf32, #tpu.memory_space<vmem>>, vector<128x64xf32>
    %41 = arith.truncf %40 : vector<128x64xf32> to vector<128x64xbf16>
    %cst_26 = arith.constant dense<0.000000e+00> : vector<128x64xf32>
    %42 = tpu.matmul %39, %41, %cst_26 {dimension_numbers = #tpu.dot_dimension_numbers<[1], [0], [0], [1], [0, 0, 1, 1], [], []>} : vector<128x128xbf16>, vector<128x64xbf16>, vector<128x64xf32> -> vector<128x64xf32>
    %43 = arith.addf %38, %42 : vector<128x64xf32>
    %c0_27 = arith.constant 0 : index
    %c0_28 = arith.constant 0 : index
    %44 = vector.load %arg10[%c0_27, %c0_28] : memref<1x64xf32, #tpu.memory_space<vmem>>, vector<1x64xf32>
    %45 = vector.broadcast %44 : vector<1x64xf32> to vector<128x64xf32>
    %46 = arith.addf %43, %45 : vector<128x64xf32>
    %47 = arith.truncf %34 : vector<128x128xf32> to vector<128x128xbf16>
    %c0_29 = arith.constant 0 : index
    %c0_30 = arith.constant 0 : index
    %48 = vector.load %arg11[%c0_29, %c0_30] : memref<128x32xf32, #tpu.memory_space<vmem>>, vector<128x32xf32>
    %49 = arith.truncf %48 : vector<128x32xf32> to vector<128x32xbf16>
    %cst_31 = arith.constant dense<0.000000e+00> : vector<128x32xf32>
    %50 = tpu.matmul %47, %49, %cst_31 {dimension_numbers = #tpu.dot_dimension_numbers<[1], [0], [0], [1], [0, 0, 1, 1], [], []>} : vector<128x128xbf16>, vector<128x32xbf16>, vector<128x32xf32> -> vector<128x32xf32>
    %c0_32 = arith.constant 0 : index
    %c0_33 = arith.constant 0 : index
    %51 = vector.load %arg12[%c0_32, %c0_33] : memref<1x32xf32, #tpu.memory_space<vmem>>, vector<1x32xf32>
    %52 = vector.broadcast %51 : vector<1x32xf32> to vector<128x32xf32>
    %53 = arith.addf %50, %52 : vector<128x32xf32>
    %c0_34 = arith.constant 0 : index
    %c0_35 = arith.constant 0 : index
    %54 = vector.load %arg13[%c0_34, %c0_35] : memref<1x32xf32, #tpu.memory_space<vmem>>, vector<1x32xf32>
    %55 = vector.broadcast %54 : vector<1x32xf32> to vector<128x32xf32>
    %56 = arith.mulf %18, %55 : vector<128x32xf32>
    %cst_36 = arith.constant dense<0.000000e+00> : vector<128xf32>
    %57 = vector.multi_reduction <add>, %56, %cst_36 [1] : vector<128x32xf32> to vector<128xf32>
    %58 = vector.shape_cast %57 : vector<128xf32> to vector<128x1xf32>
    %c0_37 = arith.constant 0 : index
    %c0_38 = arith.constant 0 : index
    %59 = vector.load %arg14[%c0_37, %c0_38] : memref<1x32xf32, #tpu.memory_space<vmem>>, vector<1x32xf32>
    %60 = vector.broadcast %59 : vector<1x32xf32> to vector<128x32xf32>
    %61 = arith.mulf %53, %60 : vector<128x32xf32>
    %cst_39 = arith.constant dense<0.000000e+00> : vector<128xf32>
    %62 = vector.multi_reduction <add>, %61, %cst_39 [1] : vector<128x32xf32> to vector<128xf32>
    %63 = vector.shape_cast %62 : vector<128xf32> to vector<128x1xf32>
    %64 = arith.addf %58, %63 : vector<128x1xf32>
    %c0_40 = arith.constant 0 : index
    %c0_41 = arith.constant 0 : index
    %65 = vector.load %arg15[%c0_40, %c0_41] : memref<1x64xf32, #tpu.memory_space<vmem>>, vector<1x64xf32>
    %66 = vector.broadcast %65 : vector<1x64xf32> to vector<128x64xf32>
    %67 = arith.mulf %46, %66 : vector<128x64xf32>
    %cst_42 = arith.constant dense<0.000000e+00> : vector<128xf32>
    %68 = vector.multi_reduction <add>, %67, %cst_42 [1] : vector<128x64xf32> to vector<128xf32>
    %69 = vector.shape_cast %68 : vector<128xf32> to vector<128x1xf32>
    %70 = arith.addf %64, %69 : vector<128x1xf32>
    %c0_43 = arith.constant 0 : index
    %c0_44 = arith.constant 0 : index
    %71 = vector.load %arg16[%c0_43, %c0_44] : memref<1x1xf32, #tpu.memory_space<vmem>>, vector<1x1xf32>
    %72 = vector.broadcast %71 : vector<1x1xf32> to vector<128x1xf32>
    %73 = arith.addf %70, %72 : vector<128x1xf32>
    %74 = arith.negf %73 : vector<128x1xf32>
    %75 = math.exp %74 : vector<128x1xf32>
    %cst_45 = arith.constant 1.000000e+00 : f32
    %76 = vector.broadcast %cst_45 : f32 to vector<128x1xf32>
    %77 = arith.addf %76, %75 : vector<128x1xf32>
    %78 = arith.divf %76, %77 : vector<128x1xf32>
    %c0_46 = arith.constant 0 : index
    %c0_47 = arith.constant 0 : index
    %79 = vector.load %arg17[%c0_46, %c0_47] : memref<128x1xf32, #tpu.memory_space<vmem>>, vector<128x1xf32>
    tpu.vector_store %arg17[%c0_46, %c0_47], %78 {strides = array<i32>} : memref<128x1xf32, #tpu.memory_space<vmem>>, vector<128x1xf32>,
    %cst_48 = arith.constant 1.000000e+00 : f32
    %80 = vector.broadcast %cst_48 : f32 to vector<128x1xf32>
    %81 = arith.subf %78, %80 : vector<128x1xf32>
    %82 = arith.mulf %81, %81 : vector<128x1xf32>
    %83 = vector.shape_cast %82 : vector<128x1xf32> to vector<1x128x1xf32>
    %cst_49 = arith.constant dense<0.000000e+00> : vector<1xf32>
    %84 = vector.multi_reduction <add>, %83, %cst_49 [1, 2] : vector<1x128x1xf32> to vector<1xf32>
    %85 = vector.shape_cast %84 : vector<1xf32> to vector<1x1x1xf32>
    %86 = vector.extract %85[0, 0, 0] : f32 from vector<1x1x1xf32>
    %87 = vector.broadcast %86 : f32 to vector<1x1xf32>
    %cst_50 = arith.constant 1.280000e+02 : f32
    %88 = vector.broadcast %cst_50 : f32 to vector<1x1xf32>
    %89 = arith.divf %87, %88 : vector<1x1xf32>
    %c0_51 = arith.constant 0 : index
    %c0_52 = arith.constant 0 : index
    %90 = vector.load %arg18[%c0_51, %c0_52] : memref<1x1xf32, #tpu.memory_space<vmem>>, vector<1x1xf32>
    tpu.vector_store %arg18[%c0_51, %c0_52], %89 {strides = array<i32>} : memref<1x1xf32, #tpu.memory_space<vmem>>, vector<1x1xf32>,
    return
  }
}

</mosaic_0001>

<llo_original>
// kernel: adaptor_forward.1
$region0: #{adaptor_forward.1}
  #allocation0 [shape = 'u32[]', space=smem, size = 0x4, offset = 0x4, fixed_abs, tag = 'smem constant byte address 0x4 - core index']
  #allocation1 [shape = 'u32[144,128]{1,0:T(1,128)}', space=vmem, size = 0x12000, scoped, tag = 'internal scratch']
  #allocation2 [shape = 'f32[1,1]{1,0:T(1,128)S(1)}', space=vmem, size = 0x200, scoped, tag = 'scoped memory for adaptor_forward.1']
  %s0 = inlined_call_operand.vmem [shape: s32[128,1], index: 0, kind: input, shape index: {}]
  %s1 = inlined_call_operand.vmem [shape: s32[128,1], index: 1, kind: input, shape index: {}]
  %s2 = inlined_call_operand.vmem [shape: f32[16,32], index: 2, kind: input, shape index: {}]
  %s3 = inlined_call_operand.vmem [shape: f32[32,64], index: 3, kind: input, shape index: {}]
  %s4 = inlined_call_operand.vmem [shape: f32[128,64], index: 4, kind: input, shape index: {}]
  %s5 = inlined_call_operand.vmem [shape: f32[128,64], index: 5, kind: input, shape index: {}]
  %s6 = inlined_call_operand.vmem [shape: f32[64,128], index: 6, kind: input, shape index: {}]
  %s7 = inlined_call_operand.vmem [shape: f32[1,128], index: 7, kind: input, shape index: {}]
  %s8 = inlined_call_operand.vmem [shape: f32[128,64], index: 8, kind: input, shape index: {}]
  %s9 = inlined_call_operand.vmem [shape: f32[128,64], index: 9, kind: input, shape index: {}]
  %s10 = inlined_call_operand.vmem [shape: f32[1,64], index: 10, kind: input, shape index: {}]
  %s11 = inlined_call_operand.vmem [shape: f32[128,32], index: 11, kind: input, shape index: {}]
  %s12 = inlined_call_operand.vmem [shape: f32[1,32], index: 12, kind: input, shape index: {}]
  %s13 = inlined_call_operand.vmem [shape: f32[1,32], index: 13, kind: input, shape index: {}]
  %s14 = inlined_call_operand.vmem [shape: f32[1,32], index: 14, kind: input, shape index: {}]
  %s15 = inlined_call_operand.vmem [shape: f32[1,64], index: 15, kind: input, shape index: {}]
  %s16 = inlined_call_operand.<no memory space> [shape: f32[1,1], index: 16, kind: input, shape index: {}]
  %s17 = inlined_call_operand.vmem [shape: f32[128,1], index: 17, kind: output, shape index: {0}]
  %s18 = inlined_call_operand.hbm [shape: f32[1,1], index: 18, kind: output, shape index: {1}]
  %19 = xla_tuple %s17, %s18
  %s20 = sld [smem:[#allocation0]]
  $region86: #{adaptor_forward.1} parent=0
    _
  %s22 = ssub.s32 1, %s20
  %s23 = scalar_select 0, %s22, %s20
  %v24 = vstv %s16
  %25 = vst [vmem:[#allocation2] sm:$0x1] %v24
  $region1: #{adaptor_forward.1} parent=0
    #allocation3 [shape = 'u8[512]{0}', space=vmem, size = 0x400, scoped, tag = 'output window, operand 1, single buffered']
    #allocation4 [shape = 's32[1]{0}', space=sflag, size = 0x4, scoped, tag = 'scoped memory for adaptor_forward.1']
    %26 = vsyncpa [#allocation4], 0
    // Predicated region
    $region2: #{adaptor_forward.1} parent=1 // pred_check
      _
    $region3: #{adaptor_forward.1} parent=1 // pred_check_branch
      %28 = sbr.rel (0) target = $region5
    $region4: #{adaptor_forward.1} parent=1 // pred_region
      _
    $region5: #{adaptor_forward.1} parent=1 // pred_fallthru
      _
    // Predicated region
    $region6: #{adaptor_forward.1} parent=1 // pred_check
      _
    $region7: #{adaptor_forward.1} parent=1 // pred_check_branch
      %30 = sbr.rel (0) target = $region9
    $region8: #{adaptor_forward.1} parent=1 // pred_region
      _
    $region9: #{adaptor_forward.1} parent=1 // pred_fallthru
      _
    // Predicated region
    $region10: #{adaptor_forward.1} parent=1 // pred_check
      _
    $region11: #{adaptor_forward.1} parent=1 // pred_check_branch
      %32 = sbr.rel (0) target = $region13
    $region12: #{adaptor_forward.1} parent=1 // pred_region
      _
    $region13: #{adaptor_forward.1} parent=1 // pred_fallthru
      _
    // Predicated region
    $region14: #{adaptor_forward.1} parent=1 // pred_check
      _
    $region15: #{adaptor_forward.1} parent=1 // pred_check_branch
      %34 = sbr.rel (0) target = $region17
    $region16: #{adaptor_forward.1} parent=1 // pred_region
      _
    $region17: #{adaptor_forward.1} parent=1 // pred_fallthru
      _
    // Predicated region
    $region18: #{adaptor_forward.1} parent=1 // pred_check
      _
    $region19: #{adaptor_forward.1} parent=1 // pred_check_branch
      %36 = sbr.rel (0) target = $region21
    $region20: #{adaptor_forward.1} parent=1 // pred_region
      _
    $region21: #{adaptor_forward.1} parent=1 // pred_fallthru
      _
    // Predicated region
    $region22: #{adaptor_forward.1} parent=1 // pred_check
      _
    $region23: #{adaptor_forward.1} parent=1 // pred_check_branch
      %38 = sbr.rel (0) target = $region25
    $region24: #{adaptor_forward.1} parent=1 // pred_region
      _
    $region25: #{adaptor_forward.1} parent=1 // pred_fallthru
      _
    // Predicated region
    $region26: #{adaptor_forward.1} parent=1 // pred_check
      _
    $region27: #{adaptor_forward.1} parent=1 // pred_check_branch
      %40 = sbr.rel (0) target = $region29
    $region28: #{adaptor_forward.1} parent=1 // pred_region
      _
    $region29: #{adaptor_forward.1} parent=1 // pred_fallthru
      _
    // Predicated region
    $region30: #{adaptor_forward.1} parent=1 // pred_check
      _
    $region31: #{adaptor_forward.1} parent=1 // pred_check_branch
      %42 = sbr.rel (0) target = $region33
    $region32: #{adaptor_forward.1} parent=1 // pred_region
      _
    $region33: #{adaptor_forward.1} parent=1 // pred_fallthru
      _
    // Predicated region
    $region34: #{adaptor_forward.1} parent=1 // pred_check
      _
    $region35: #{adaptor_forward.1} parent=1 // pred_check_branch
      %44 = sbr.rel (0) target = $region37
    $region36: #{adaptor_forward.1} parent=1 // pred_region
      _
    $region37: #{adaptor_forward.1} parent=1 // pred_fallthru
      _
    // Predicated region
    $region38: #{adaptor_forward.1} parent=1 // pred_check
      _
    $region39: #{adaptor_forward.1} parent=1 // pred_check_branch
      %46 = sbr.rel (0) target = $region41
    $region40: #{adaptor_forward.1} parent=1 // pred_region
      _
    $region41: #{adaptor_forward.1} parent=1 // pred_fallthru
      _
    // Predicated region
    $region42: #{adaptor_forward.1} parent=1 // pred_check
      _
    $region43: #{adaptor_forward.1} parent=1 // pred_check_branch
      %48 = sbr.rel (0) target = $region45
    $region44: #{adaptor_forward.1} parent=1 // pred_region
      _
    $region45: #{adaptor_forward.1} parent=1 // pred_fallthru
      _
    // Predicated region
    $region46: #{adaptor_forward.1} parent=1 // pred_check
      _
    $region47: #{adaptor_forward.1} parent=1 // pred_check_branch
      %50 = sbr.rel (0) target = $region49
    $region48: #{adaptor_forward.1} parent=1 // pred_region
      _
    $region49: #{adaptor_forward.1} parent=1 // pred_fallthru
      _
    // Predicated region
    $region50: #{adaptor_forward.1} parent=1 // pred_check
      _
    $region51: #{adaptor_forward.1} parent=1 // pred_check_branch
      %52 = sbr.rel (0) target = $region53
    $region52: #{adaptor_forward.1} parent=1 // pred_region
      _
    $region53: #{adaptor_forward.1} parent=1 // pred_fallthru
      _
    // Predicated region
    $region54: #{adaptor_forward.1} parent=1 // pred_check
      _
    $region55: #{adaptor_forward.1} parent=1 // pred_check_branch
      %54 = sbr.rel (0) target = $region57
    $region56: #{adaptor_forward.1} parent=1 // pred_region
      _
    $region57: #{adaptor_forward.1} parent=1 // pred_fallthru
      _
    // Predicated region
    $region58: #{adaptor_forward.1} parent=1 // pred_check
      _
    $region59: #{adaptor_forward.1} parent=1 // pred_check_branch
      %56 = sbr.rel (0) target = $region61
    $region60: #{adaptor_forward.1} parent=1 // pred_region
      _
    $region61: #{adaptor_forward.1} parent=1 // pred_fallthru
      _
    // Predicated region
    $region62: #{adaptor_forward.1} parent=1 // pred_check
      _
    $region63: #{adaptor_forward.1} parent=1 // pred_check_branch
      %58 = sbr.rel (0) target = $region65
    $region64: #{adaptor_forward.1} parent=1 // pred_region
      _
    $region65: #{adaptor_forward.1} parent=1 // pred_fallthru
      _
    // Predicated region
    $region66: #{adaptor_forward.1} parent=1 // pred_check
      _
    $region67: #{adaptor_forward.1} parent=1 // pred_check_branch
      %60 = sbr.rel (0) target = $region69
    $region68: #{adaptor_forward.1} parent=1 // pred_region
      _
    $region69: #{adaptor_forward.1} parent=1 // pred_fallthru
      _
    %v62 = vld [vmem:[%s0] sm:$0xff]
    %v63 = vld [vmem:[%s0 + $0x8] sm:$0xff]
    %v64 = vld [vmem:[%s0 + $0x10] sm:$0xff]
    %v65 = vld [vmem:[%s0 + $0x18] sm:$0xff]
    %v66 = vld [vmem:[%s0 + $0x20] sm:$0xff]
    %v67 = vld [vmem:[%s0 + $0x28] sm:$0xff]
    %v68 = vld [vmem:[%s0 + $0x30] sm:$0xff]
    %v69 = vld [vmem:[%s0 + $0x38] sm:$0xff]
    %v70 = vld [vmem:[%s0 + $0x40] sm:$0xff]
    %v71 = vld [vmem:[%s0 + $0x48] sm:$0xff]
    %v72 = vld [vmem:[%s0 + $0x50] sm:$0xff]
    %v73 = vld [vmem:[%s0 + $0x58] sm:$0xff]
    %v74 = vld [vmem:[%s0 + $0x60] sm:$0xff]
    %v75 = vld [vmem:[%s0 + $0x68] sm:$0xff]
    %v76 = vld [vmem:[%s0 + $0x70] sm:$0xff]
    %v77 = vld [vmem:[%s0 + $0x78] sm:$0xff]
    %v78 = vld [vmem:[%s1] sm:$0xff]
    %v79 = vld [vmem:[%s1 + $0x8] sm:$0xff]
    %v80 = vld [vmem:[%s1 + $0x10] sm:$0xff]
    %v81 = vld [vmem:[%s1 + $0x18] sm:$0xff]
    %v82 = vld [vmem:[%s1 + $0x20] sm:$0xff]
    %v83 = vld [vmem:[%s1 + $0x28] sm:$0xff]
    %v84 = vld [vmem:[%s1 + $0x30] sm:$0xff]
    %v85 = vld [vmem:[%s1 + $0x38] sm:$0xff]
    %v86 = vld [vmem:[%s1 + $0x40] sm:$0xff]
    %v87 = vld [vmem:[%s1 + $0x48] sm:$0xff]
    %v88 = vld [vmem:[%s1 + $0x50] sm:$0xff]
    %v89 = vld [vmem:[%s1 + $0x58] sm:$0xff]
    %v90 = vld [vmem:[%s1 + $0x60] sm:$0xff]
    %v91 = vld [vmem:[%s1 + $0x68] sm:$0xff]
    %v92 = vld [vmem:[%s1 + $0x70] sm:$0xff]
    %v93 = vld [vmem:[%s1 + $0x78] sm:$0xff]
    %v94 = vlaneseq
    %v95 = vand.u32 %v94, 127
    %96 = vset.pattern.permute.xlu0 0
    %97 = vperm.xlu0 %96, %v62
    %v98 = vpop.permute.xlu0 %97
    %99 = vset.pattern.permute.xlu0 0
    %100 = vperm.xlu0 %99, %v63
    %v101 = vpop.permute.xlu0 %100
    %102 = vset.pattern.permute.xlu0 0
    %103 = vperm.xlu0 %102, %v64
    %v104 = vpop.permute.xlu0 %103
    %105 = vset.pattern.permute.xlu0 0
    %106 = vperm.xlu0 %105, %v65
    %v107 = vpop.permute.xlu0 %106
    %108 = vset.pattern.permute.xlu0 0
    %109 = vperm.xlu0 %108, %v66
    %v110 = vpop.permute.xlu0 %109
    %111 = vset.pattern.permute.xlu0 0
    %112 = vperm.xlu0 %111, %v67
    %v113 = vpop.permute.xlu0 %112
    %114 = vset.pattern.permute.xlu0 0
    %115 = vperm.xlu0 %114, %v68
    %v116 = vpop.permute.xlu0 %115
    %117 = vset.pattern.permute.xlu0 0
    %118 = vperm.xlu0 %117, %v69
    %v119 = vpop.permute.xlu0 %118
    %120 = vset.pattern.permute.xlu0 0
    %121 = vperm.xlu0 %120, %v70
    %v122 = vpop.permute.xlu0 %121
    %123 = vset.pattern.permute.xlu0 0
    %124 = vperm.xlu0 %123, %v71
    %v125 = vpop.permute.xlu0 %124
    %126 = vset.pattern.permute.xlu0 0
    %127 = vperm.xlu0 %126, %v72
    %v128 = vpop.permute.xlu0 %127
    %129 = vset.pattern.permute.xlu0 0
    %130 = vperm.xlu0 %129, %v73
    %v131 = vpop.permute.xlu0 %130
    %132 = vset.pattern.permute.xlu0 0
    %133 = vperm.xlu0 %132, %v74
    %v134 = vpop.permute.xlu0 %133
    %135 = vset.pattern.permute.xlu0 0
    %136 = vperm.xlu0 %135, %v75
    %v137 = vpop.permute.xlu0 %136
    %138 = vset.pattern.permute.xlu0 0
    %139 = vperm.xlu0 %138, %v76
    %v140 = vpop.permute.xlu0 %139
    %141 = vset.pattern.permute.xlu0 0
    %142 = vperm.xlu0 %141, %v77
    %v143 = vpop.permute.xlu0 %142
    %vm144 = vcmp.eq.s32.totalorder %v95, %v98
    %vm145 = vcmp.eq.s32.totalorder %v95, %v101
    %vm146 = vcmp.eq.s32.totalorder %v95, %v104
    %vm147 = vcmp.eq.s32.totalorder %v95, %v107
    %vm148 = vcmp.eq.s32.totalorder %v95, %v110
    %vm149 = vcmp.eq.s32.totalorder %v95, %v113
    %vm150 = vcmp.eq.s32.totalorder %v95, %v116
    %vm151 = vcmp.eq.s32.totalorder %v95, %v119
    %vm152 = vcmp.eq.s32.totalorder %v95, %v122
    %vm153 = vcmp.eq.s32.totalorder %v95, %v125
    %vm154 = vcmp.eq.s32.totalorder %v95, %v128
    %vm155 = vcmp.eq.s32.totalorder %v95, %v131
    %vm156 = vcmp.eq.s32.totalorder %v95, %v134
    %vm157 = vcmp.eq.s32.totalorder %v95, %v137
    %vm158 = vcmp.eq.s32.totalorder %v95, %v140
    %vm159 = vcmp.eq.s32.totalorder %v95, %v143
    %v160 = vsel %vm144, 1.0, 0.0
    %v161 = vsel %vm145, 1.0, 0.0
    %v162 = vsel %vm146, 1.0, 0.0
    %v163 = vsel %vm147, 1.0, 0.0
    %v164 = vsel %vm148, 1.0, 0.0
    %v165 = vsel %vm149, 1.0, 0.0
    %v166 = vsel %vm150, 1.0, 0.0
    %v167 = vsel %vm151, 1.0, 0.0
    %v168 = vsel %vm152, 1.0, 0.0
    %v169 = vsel %vm153, 1.0, 0.0
    %v170 = vsel %vm154, 1.0, 0.0
    %v171 = vsel %vm155, 1.0, 0.0
    %v172 = vsel %vm156, 1.0, 0.0
    %v173 = vsel %vm157, 1.0, 0.0
    %v174 = vsel %vm158, 1.0, 0.0
    %v175 = vsel %vm159, 1.0, 0.0
    %v176 = vpack.c.bf16 %v161, %v160
    %v177 = vpack.c.bf16 %v163, %v162
    %v178 = vpack.c.bf16 %v165, %v164
    %v179 = vpack.c.bf16 %v167, %v166
    %v180 = vpack.c.bf16 %v169, %v168
    %v181 = vpack.c.bf16 %v171, %v170
    %v182 = vpack.c.bf16 %v173, %v172
    %v183 = vpack.c.bf16 %v175, %v174
    %184 = vset.pattern.permute.xlu0 0
    %185 = vperm.xlu0 %184, %v78
    %v186 = vpop.permute.xlu0 %185
    %187 = vset.pattern.permute.xlu0 0
    %188 = vperm.xlu0 %187, %v79
    %v189 = vpop.permute.xlu0 %188
    %190 = vset.pattern.permute.xlu0 0
    %191 = vperm.xlu0 %190, %v80
    %v192 = vpop.permute.xlu0 %191
    %193 = vset.pattern.permute.xlu0 0
    %194 = vperm.xlu0 %193, %v81
    %v195 = vpop.permute.xlu0 %194
    %196 = vset.pattern.permute.xlu0 0
    %197 = vperm.xlu0 %196, %v82
    %v198 = vpop.permute.xlu0 %197
    %199 = vset.pattern.permute.xlu0 0
    %200 = vperm.xlu0 %199, %v83
    %v201 = vpop.permute.xlu0 %200
    %202 = vset.pattern.permute.xlu0 0
    %203 = vperm.xlu0 %202, %v84
    %v204 = vpop.permute.xlu0 %203
    %205 = vset.pattern.permute.xlu0 0
    %206 = vperm.xlu0 %205, %v85
    %v207 = vpop.permute.xlu0 %206
    %208 = vset.pattern.permute.xlu0 0
    %209 = vperm.xlu0 %208, %v86
    %v210 = vpop.permute.xlu0 %209
    %211 = vset.pattern.permute.xlu0 0
    %212 = vperm.xlu0 %211, %v87
    %v213 = vpop.permute.xlu0 %212
    %214 = vset.pattern.permute.xlu0 0
    %215 = vperm.xlu0 %214, %v88
    %v216 = vpop.permute.xlu0 %215
    %217 = vset.pattern.permute.xlu0 0
    %218 = vperm.xlu0 %217, %v89
    %v219 = vpop.permute.xlu0 %218
    %220 = vset.pattern.permute.xlu0 0
    %221 = vperm.xlu0 %220, %v90
    %v222 = vpop.permute.xlu0 %221
    %223 = vset.pattern.permute.xlu0 0
    %224 = vperm.xlu0 %223, %v91
    %v225 = vpop.permute.xlu0 %224
    %226 = vset.pattern.permute.xlu0 0
    %227 = vperm.xlu0 %226, %v92
    %v228 = vpop.permute.xlu0 %227
    %229 = vset.pattern.permute.xlu0 0
    %230 = vperm.xlu0 %229, %v93
    %v231 = vpop.permute.xlu0 %230
    %vm232 = vcmp.eq.s32.totalorder %v95, %v186
    %vm233 = vcmp.eq.s32.totalorder %v95, %v189
    %vm234 = vcmp.eq.s32.totalorder %v95, %v192
    %vm235 = vcmp.eq.s32.totalorder %v95, %v195
    %vm236 = vcmp.eq.s32.totalorder %v95, %v198
    %vm237 = vcmp.eq.s32.totalorder %v95, %v201
    %vm238 = vcmp.eq.s32.totalorder %v95, %v204
    %vm239 = vcmp.eq.s32.totalorder %v95, %v207
    %vm240 = vcmp.eq.s32.totalorder %v95, %v210
    %vm241 = vcmp.eq.s32.totalorder %v95, %v213
    %vm242 = vcmp.eq.s32.totalorder %v95, %v216
    %vm243 = vcmp.eq.s32.totalorder %v95, %v219
    %vm244 = vcmp.eq.s32.totalorder %v95, %v222
    %vm245 = vcmp.eq.s32.totalorder %v95, %v225
    %vm246 = vcmp.eq.s32.totalorder %v95, %v228
    %vm247 = vcmp.eq.s32.totalorder %v95, %v231
    %v248 = vsel %vm232, 1.0, 0.0
    %v249 = vsel %vm233, 1.0, 0.0
    %v250 = vsel %vm234, 1.0, 0.0
    %v251 = vsel %vm235, 1.0, 0.0
    %v252 = vsel %vm236, 1.0, 0.0
    %v253 = vsel %vm237, 1.0, 0.0
    %v254 = vsel %vm238, 1.0, 0.0
    %v255 = vsel %vm239, 1.0, 0.0
    %v256 = vsel %vm240, 1.0, 0.0
    %v257 = vsel %vm241, 1.0, 0.0
    %v258 = vsel %vm242, 1.0, 0.0
    %v259 = vsel %vm243, 1.0, 0.0
    %v260 = vsel %vm244, 1.0, 0.0
    %v261 = vsel %vm245, 1.0, 0.0
    %v262 = vsel %vm246, 1.0, 0.0
    %v263 = vsel %vm247, 1.0, 0.0
    %v264 = vpack.c.bf16 %v249, %v248
    %v265 = vpack.c.bf16 %v251, %v250
    %v266 = vpack.c.bf16 %v253, %v252
    %v267 = vpack.c.bf16 %v255, %v254
    %v268 = vpack.c.bf16 %v257, %v256
    %v269 = vpack.c.bf16 %v259, %v258
    %v270 = vpack.c.bf16 %v261, %v260
    %v271 = vpack.c.bf16 %v263, %v262
    %v272 = vld [vmem:[%s2] sm:$0xff]
    %v273 = vld [vmem:[%s2 + $0x8] sm:$0xff]
    %v274 = vpack.c.bf16 %v273, %v272
    %vm275 = vcmask 130048
    %v277 = vsel %vm275, %v176, 0
    %v280 = vsel %vm275, %v177, 0
    %v283 = vsel %vm275, %v178, 0
    %v286 = vsel %vm275, %v179, 0
    %v289 = vsel %vm275, %v180, 0
    %v292 = vsel %vm275, %v181, 0
    %v295 = vsel %vm275, %v182, 0
    %v298 = vsel %vm275, %v183, 0
    %300 = vmatprep.subr.bf16.mxu0 0
    %301 = vmatpush1.bf16.msra.mxu0 %v274
    %302 = vmatprep.subr.bf16.mxu0 0
    %303 = vmatpush1.bf16.msra.mxu0 0
    %304 = vmatprep.subr.bf16.mxu0 0
    %305 = vmatpush1.bf16.msra.mxu0 0
    %306 = vmatprep.subr.bf16.mxu0 0
    %307 = vmatpush1.bf16.msra.mxu0 0
    %308 = vmatprep.subr.bf16.mxu0 0
    %309 = vmatpush1.bf16.msra.mxu0 0
    %310 = vmatprep.subr.bf16.mxu0 0
    %311 = vmatpush1.bf16.msra.mxu0 0
    %312 = vmatprep.subr.bf16.mxu0 0
    %313 = vmatpush1.bf16.msra.mxu0 0
    %314 = vmatprep.subr.bf16.mxu0 0
    %315 = vmatpush1.bf16.msra.mxu0 0
    %316 = vmatprep.subr.bf16.mxu0 0
    %317 = vmatpush1.bf16.msra.mxu0 0
    %318 = vmatprep.subr.bf16.mxu0 0
    %319 = vmatpush1.bf16.msra.mxu0 0
    %320 = vmatprep.subr.bf16.mxu0 0
    %321 = vmatpush1.bf16.msra.mxu0 0
    %322 = vmatprep.subr.bf16.mxu0 0
    %323 = vmatpush1.bf16.msra.mxu0 0
    %324 = vmatprep.subr.bf16.mxu0 0
    %325 = vmatpush1.bf16.msra.mxu0 0
    %326 = vmatprep.subr.bf16.mxu0 0
    %327 = vmatpush1.bf16.msra.mxu0 0
    %328 = vmatprep.subr.bf16.mxu0 0
    %329 = vmatpush1.bf16.msra.mxu0 0
    %330 = vmatprep.subr.bf16.mxu0 0
    %331 = vmatpush1.bf16.msra.mxu0 0
    %332 = vmatprep.mubr.bf16.mxu0 0
    %333 = vmatmul.mubr.bf16.gmra.mrb[0].mxu0 %v277
    %v334 = vpop.f32.mrb[0].mxu0
    %v335 = vadd.f32 0.0, %v334
    %v336 = vpop.f32.mrb[0].mxu0
    %v337 = vpop.f32.mrb[0].mxu0
    %v338 = vadd.f32 0.0, %v337
    %v339 = vpop.f32.mrb[0].mxu0
    %340 = vmatprep.mubr.bf16.mxu0 0
    %341 = vmatmul.mubr.bf16.gmra.mrb[0].mxu0 %v280
    %v342 = vpop.f32.mrb[0].mxu0
    %v343 = vadd.f32 0.0, %v342
    %v344 = vpop.f32.mrb[0].mxu0
    %v345 = vpop.f32.mrb[0].mxu0
    %v346 = vadd.f32 0.0, %v345
    %v347 = vpop.f32.mrb[0].mxu0
    %348 = vmatprep.mubr.bf16.mxu0 0
    %349 = vmatmul.mubr.bf16.gmra.mrb[0].mxu0 %v283
    %v350 = vpop.f32.mrb[0].mxu0
    %v351 = vadd.f32 0.0, %v350
    %v352 = vpop.f32.mrb[0].mxu0
    %v353 = vpop.f32.mrb[0].mxu0
    %v354 = vadd.f32 0.0, %v353
    %v355 = vpop.f32.mrb[0].mxu0
    %356 = vmatprep.mubr.bf16.mxu0 0
    %357 = vmatmul.mubr.bf16.gmra.mrb[0].mxu0 %v286
    %v358 = vpop.f32.mrb[0].mxu0
    %v359 = vadd.f32 0.0, %v358
    %v360 = vpop.f32.mrb[0].mxu0
    %v361 = vpop.f32.mrb[0].mxu0
    %v362 = vadd.f32 0.0, %v361
    %v363 = vpop.f32.mrb[0].mxu0
    %364 = vmatprep.mubr.bf16.mxu0 0
    %365 = vmatmul.mubr.bf16.gmra.mrb[0].mxu0 %v289
    %v366 = vpop.f32.mrb[0].mxu0
    %v367 = vadd.f32 0.0, %v366
    %v368 = vpop.f32.mrb[0].mxu0
    %v369 = vpop.f32.mrb[0].mxu0
    %v370 = vadd.f32 0.0, %v369
    %v371 = vpop.f32.mrb[0].mxu0
    %372 = vmatprep.mubr.bf16.mxu0 0
    %373 = vmatmul.mubr.bf16.gmra.mrb[0].mxu0 %v292
    %v374 = vpop.f32.mrb[0].mxu0
    %v375 = vadd.f32 0.0, %v374
    %v376 = vpop.f32.mrb[0].mxu0
    %v377 = vpop.f32.mrb[0].mxu0
    %v378 = vadd.f32 0.0, %v377
    %v379 = vpop.f32.mrb[0].mxu0
    %380 = vmatprep.mubr.bf16.mxu0 0
    %381 = vmatmul.mubr.bf16.gmra.mrb[0].mxu0 %v295
    %v382 = vpop.f32.mrb[0].mxu0
    %v383 = vadd.f32 0.0, %v382
    %v384 = vpop.f32.mrb[0].mxu0
    %v385 = vpop.f32.mrb[0].mxu0
    %v386 = vadd.f32 0.0, %v385
    %v387 = vpop.f32.mrb[0].mxu0
    %388 = vmatprep.mubr.bf16.mxu0 0
    %389 = vmatmul.mubr.bf16.gmra.mrb[0].mxu0 %v298
    %v390 = vpop.f32.mrb[0].mxu0
    %v391 = vadd.f32 0.0, %v390
    %v392 = vpop.f32.mrb[0].mxu0
    %v393 = vpop.f32.mrb[0].mxu0
    %v394 = vadd.f32 0.0, %v393
    %v395 = vpop.f32.mrb[0].mxu0
    %396 = vdwg.mxu0
    %v397 = vld [vmem:[%s3] sm:$0xff]
    %v398 = vld [vmem:[%s3 + $0x8] sm:$0xff]
    %v399 = vld [vmem:[%s3 + $0x10] sm:$0xff]
    %v400 = vld [vmem:[%s3 + $0x18] sm:$0xff]
    %v401 = vpack.c.bf16 %v398, %v397
    %v402 = vpack.c.bf16 %v400, %v399
    %vm403 = vcmask 261120
    %v405 = vsel %vm403, %v264, 0
    %v408 = vsel %vm403, %v265, 0
    %v411 = vsel %vm403, %v266, 0
    %v414 = vsel %vm403, %v267, 0
    %v417 = vsel %vm403, %v268, 0
    %v420 = vsel %vm403, %v269, 0
    %v423 = vsel %vm403, %v270, 0
    %v426 = vsel %vm403, %v271, 0
    %428 = vmatprep.subr.bf16.mxu0 0
    %429 = vmatpush1.bf16.msra.mxu0 %v401
    %430 = vmatprep.subr.bf16.mxu0 0
    %431 = vmatpush1.bf16.msra.mxu0 %v402
    %432 = vmatprep.subr.bf16.mxu0 0
    %433 = vmatpush1.bf16.msra.mxu0 0
    %434 = vmatprep.subr.bf16.mxu0 0
    %435 = vmatpush1.bf16.msra.mxu0 0
    %436 = vmatprep.subr.bf16.mxu0 0
    %437 = vmatpush1.bf16.msra.mxu0 0
    %438 = vmatprep.subr.bf16.mxu0 0
    %439 = vmatpush1.bf16.msra.mxu0 0
    %440 = vmatprep.subr.bf16.mxu0 0
    %441 = vmatpush1.bf16.msra.mxu0 0
    %442 = vmatprep.subr.bf16.mxu0 0
    %443 = vmatpush1.bf16.msra.mxu0 0
    %444 = vmatprep.subr.bf16.mxu0 0
    %445 = vmatpush1.bf16.msra.mxu0 0
    %446 = vmatprep.subr.bf16.mxu0 0
    %447 = vmatpush1.bf16.msra.mxu0 0
    %448 = vmatprep.subr.bf16.mxu0 0
    %449 = vmatpush1.bf16.msra.mxu0 0
    %450 = vmatprep.subr.bf16.mxu0 0
    %451 = vmatpush1.bf16.msra.mxu0 0
    %452 = vmatprep.subr.bf16.mxu0 0
    %453 = vmatpush1.bf16.msra.mxu0 0
    %454 = vmatprep.subr.bf16.mxu0 0
    %455 = vmatpush1.bf16.msra.mxu0 0
    %456 = vmatprep.subr.bf16.mxu0 0
    %457 = vmatpush1.bf16.msra.mxu0 0
    %458 = vmatprep.subr.bf16.mxu0 0
    %459 = vmatpush1.bf16.msra.mxu0 0
    %460 = vmatprep.mubr.bf16.mxu0 0
    %461 = vmatmul.mubr.bf16.gmra.mrb[0].mxu0 %v405
    %v462 = vpop.f32.mrb[0].mxu0
    %v463 = vadd.f32 0.0, %v462
    %v464 = vpop.f32.mrb[0].mxu0
    %v465 = vpop.f32.mrb[0].mxu0
    %v466 = vadd.f32 0.0, %v465
    %v467 = vpop.f32.mrb[0].mxu0
    %468 = vmatprep.mubr.bf16.mxu0 0
    %469 = vmatmul.mubr.bf16.gmra.mrb[0].mxu0 %v408
    %v470 = vpop.f32.mrb[0].mxu0
    %v471 = vadd.f32 0.0, %v470
    %v472 = vpop.f32.mrb[0].mxu0
    %v473 = vpop.f32.mrb[0].mxu0
    %v474 = vadd.f32 0.0, %v473
    %v475 = vpop.f32.mrb[0].mxu0
    %476 = vmatprep.mubr.bf16.mxu0 0
    %477 = vmatmul.mubr.bf16.gmra.mrb[0].mxu0 %v411
    %v478 = vpop.f32.mrb[0].mxu0
    %v479 = vadd.f32 0.0, %v478
    %v480 = vpop.f32.mrb[0].mxu0
    %v481 = vpop.f32.mrb[0].mxu0
    %v482 = vadd.f32 0.0, %v481
    %v483 = vpop.f32.mrb[0].mxu0
    %484 = vmatprep.mubr.bf16.mxu0 0
    %485 = vmatmul.mubr.bf16.gmra.mrb[0].mxu0 %v414
    %v486 = vpop.f32.mrb[0].mxu0
    %v487 = vadd.f32 0.0, %v486
    %v488 = vpop.f32.mrb[0].mxu0
    %v489 = vpop.f32.mrb[0].mxu0
    %v490 = vadd.f32 0.0, %v489
    %v491 = vpop.f32.mrb[0].mxu0
    %492 = vmatprep.mubr.bf16.mxu0 0
    %493 = vmatmul.mubr.bf16.gmra.mrb[0].mxu0 %v417
    %v494 = vpop.f32.mrb[0].mxu0
    %v495 = vadd.f32 0.0, %v494
    %v496 = vpop.f32.mrb[0].mxu0
    %v497 = vpop.f32.mrb[0].mxu0
    %v498 = vadd.f32 0.0, %v497
    %v499 = vpop.f32.mrb[0].mxu0
    %500 = vmatprep.mubr.bf16.mxu0 0
    %501 = vmatmul.mubr.bf16.gmra.mrb[0].mxu0 %v420
    %v502 = vpop.f32.mrb[0].mxu0
    %v503 = vadd.f32 0.0, %v502
    %v504 = vpop.f32.mrb[0].mxu0
    %v505 = vpop.f32.mrb[0].mxu0
    %v506 = vadd.f32 0.0, %v505
    %v507 = vpop.f32.mrb[0].mxu0
    %508 = vmatprep.mubr.bf16.mxu0 0
    %509 = vmatmul.mubr.bf16.gmra.mrb[0].mxu0 %v423
    %v510 = vpop.f32.mrb[0].mxu0
    %v511 = vadd.f32 0.0, %v510
    %v512 = vpop.f32.mrb[0].mxu0
    %v513 = vpop.f32.mrb[0].mxu0
    %v514 = vadd.f32 0.0, %v513
    %v515 = vpop.f32.mrb[0].mxu0
    %516 = vmatprep.mubr.bf16.mxu0 0
    %517 = vmatmul.mubr.bf16.gmra.mrb[0].mxu0 %v426
    %v518 = vpop.f32.mrb[0].mxu0
    %v519 = vadd.f32 0.0, %v518
    %v520 = vpop.f32.mrb[0].mxu0
    %v521 = vpop.f32.mrb[0].mxu0
    %v522 = vadd.f32 0.0, %v521
    %v523 = vpop.f32.mrb[0].mxu0
    %524 = vdwg.mxu0
    %v525 = vld [vmem:[%s4] sm:$0xff]
    %v526 = vld [vmem:[%s4 + $0x8] sm:$0xff]
    %v527 = vld [vmem:[%s4 + $0x10] sm:$0xff]
    %v528 = vld [vmem:[%s4 + $0x18] sm:$0xff]
    %v529 = vld [vmem:[%s4 + $0x20] sm:$0xff]
    %v530 = vld [vmem:[%s4 + $0x28] sm:$0xff]
    %v531 = vld [vmem:[%s4 + $0x30] sm:$0xff]
    %v532 = vld [vmem:[%s4 + $0x38] sm:$0xff]
    %v533 = vld [vmem:[%s4 + $0x40] sm:$0xff]
    %v534 = vld [vmem:[%s4 + $0x48] sm:$0xff]
    %v535 = vld [vmem:[%s4 + $0x50] sm:$0xff]
    %v536 = vld [vmem:[%s4 + $0x58] sm:$0xff]
    %v537 = vld [vmem:[%s4 + $0x60] sm:$0xff]
    %v538 = vld [vmem:[%s4 + $0x68] sm:$0xff]
    %v539 = vld [vmem:[%s4 + $0x70] sm:$0xff]
    %v540 = vld [vmem:[%s4 + $0x78] sm:$0xff]
    %v541 = vld [vmem:[%s5] sm:$0xff]
    %v542 = vld [vmem:[%s5 + $0x8] sm:$0xff]
    %v543 = vld [vmem:[%s5 + $0x10] sm:$0xff]
    %v544 = vld [vmem:[%s5 + $0x18] sm:$0xff]
    %v545 = vld [vmem:[%s5 + $0x20] sm:$0xff]
    %v546 = vld [vmem:[%s5 + $0x28] sm:$0xff]
    %v547 = vld [vmem:[%s5 + $0x30] sm:$0xff]
    %v548 = vld [vmem:[%s5 + $0x38] sm:$0xff]
    %v549 = vld [vmem:[%s5 + $0x40] sm:$0xff]
    %v550 = vld [vmem:[%s5 + $0x48] sm:$0xff]
    %v551 = vld [vmem:[%s5 + $0x50] sm:$0xff]
    %v552 = vld [vmem:[%s5 + $0x58] sm:$0xff]
    %v553 = vld [vmem:[%s5 + $0x60] sm:$0xff]
    %v554 = vld [vmem:[%s5 + $0x68] sm:$0xff]
    %v555 = vld [vmem:[%s5 + $0x70] sm:$0xff]
    %v556 = vld [vmem:[%s5 + $0x78] sm:$0xff]
    %v557 = vpack.c.bf16 %v526, %v525
    %v558 = vpack.c.bf16 %v528, %v527
    %v559 = vpack.c.bf16 %v530, %v529
    %v560 = vpack.c.bf16 %v532, %v531
    %v561 = vpack.c.bf16 %v534, %v533
    %v562 = vpack.c.bf16 %v536, %v535
    %v563 = vpack.c.bf16 %v538, %v537
    %v564 = vpack.c.bf16 %v540, %v539
    %v565 = vpack.c.bf16 %v542, %v541
    %v566 = vpack.c.bf16 %v544, %v543
    %v567 = vpack.c.bf16 %v546, %v545
    %v568 = vpack.c.bf16 %v548, %v547
    %v569 = vpack.c.bf16 %v550, %v549
    %v570 = vpack.c.bf16 %v552, %v551
    %v571 = vpack.c.bf16 %v554, %v553
    %v572 = vpack.c.bf16 %v556, %v555
    %v573 = vpack.c.bf16 %v466, %v463
    %v574 = vpack.c.bf16 %v474, %v471
    %v575 = vpack.c.bf16 %v482, %v479
    %v576 = vpack.c.bf16 %v490, %v487
    %v577 = vpack.c.bf16 %v498, %v495
    %v578 = vpack.c.bf16 %v506, %v503
    %v579 = vpack.c.bf16 %v514, %v511
    %v580 = vpack.c.bf16 %v522, %v519
    %v581 = vld [vmem:[%s6] sm:$0xff]
    %v582 = vld [vmem:[%s6 + $0x8] sm:$0xff]
    %v583 = vld [vmem:[%s6 + $0x10] sm:$0xff]
    %v584 = vld [vmem:[%s6 + $0x18] sm:$0xff]
    %v585 = vld [vmem:[%s6 + $0x20] sm:$0xff]
    %v586 = vld [vmem:[%s6 + $0x28] sm:$0xff]
    %v587 = vld [vmem:[%s6 + $0x30] sm:$0xff]
    %v588 = vld [vmem:[%s6 + $0x38] sm:$0xff]
    %v589 = vpack.c.bf16 %v582, %v581
    %v590 = vpack.c.bf16 %v584, %v583
    %v591 = vpack.c.bf16 %v586, %v585
    %v592 = vpack.c.bf16 %v588, %v587
    %v593 = vld [vmem:[%s7] sm:$0x1]
    %v595 = vlaneseq
    %v596 = vshrl.u32 %v595, 7
    %v597 = vsub.s32 0, %v596
    %v598 = vrot.slane %v593, %v597
    %vm600 = vcmask 523264
    %v602 = vsel %vm600, %v557, 0
    %v605 = vsel %vm600, %v558, 0
    %v608 = vsel %vm600, %v559, 0
    %v611 = vsel %vm600, %v560, 0
    %v614 = vsel %vm600, %v561, 0
    %v617 = vsel %vm600, %v562, 0
    %v620 = vsel %vm600, %v563, 0
    %v623 = vsel %vm600, %v564, 0
    %v626 = vsel %vm600, %v565, 0
    %v629 = vsel %vm600, %v566, 0
    %v632 = vsel %vm600, %v567, 0
    %v635 = vsel %vm600, %v568, 0
    %v638 = vsel %vm600, %v569, 0
    %v641 = vsel %vm600, %v570, 0
    %v644 = vsel %vm600, %v571, 0
    %v647 = vsel %vm600, %v572, 0
    %v650 = vsel %vm600, %v573, 0
    %v653 = vsel %vm600, %v574, 0
    %v656 = vsel %vm600, %v575, 0
    %v659 = vsel %vm600, %v576, 0
    %v662 = vsel %vm600, %v577, 0
    %v665 = vsel %vm600, %v578, 0
    %v668 = vsel %vm600, %v579, 0
    %v671 = vsel %vm600, %v580, 0
    %673 = vmatprep.subr.bf16.mxu0 0
    %674 = vmatpush1.bf16.msra.mxu0 %v589
    %675 = vmatprep.subr.bf16.mxu0 0
    %676 = vmatpush1.bf16.msra.mxu0 %v590
    %677 = vmatprep.subr.bf16.mxu0 0
    %678 = vmatpush1.bf16.msra.mxu0 %v591
    %679 = vmatprep.subr.bf16.mxu0 0
    %680 = vmatpush1.bf16.msra.mxu0 %v592
    %681 = vmatprep.subr.bf16.mxu0 0
    %682 = vmatpush1.bf16.msra.mxu0 0
    %683 = vmatprep.subr.bf16.mxu0 0
    %684 = vmatpush1.bf16.msra.mxu0 0
    %685 = vmatprep.subr.bf16.mxu0 0
    %686 = vmatpush1.bf16.msra.mxu0 0
    %687 = vmatprep.subr.bf16.mxu0 0
    %688 = vmatpush1.bf16.msra.mxu0 0
    %689 = vmatprep.subr.bf16.mxu0 0
    %690 = vmatpush1.bf16.msra.mxu0 0
    %691 = vmatprep.subr.bf16.mxu0 0
    %692 = vmatpush1.bf16.msra.mxu0 0
    %693 = vmatprep.subr.bf16.mxu0 0
    %694 = vmatpush1.bf16.msra.mxu0 0
    %695 = vmatprep.subr.bf16.mxu0 0
    %696 = vmatpush1.bf16.msra.mxu0 0
    %697 = vmatprep.subr.bf16.mxu0 0
    %698 = vmatpush1.bf16.msra.mxu0 0
    %699 = vmatprep.subr.bf16.mxu0 0
    %700 = vmatpush1.bf16.msra.mxu0 0
    %701 = vmatprep.subr.bf16.mxu0 0
    %702 = vmatpush1.bf16.msra.mxu0 0
    %703 = vmatprep.subr.bf16.mxu0 0
    %704 = vmatpush1.bf16.msra.mxu0 0
    %705 = vmatprep.mubr.bf16.mxu0 0
    %706 = vmatmul.mubr.bf16.gmra.mrb[0].mxu0 %v602
    %v707 = vpop.f32.mrb[0].mxu0
    %v708 = vadd.f32 %v598, %v707
    %v709 = vpop.f32.mrb[0].mxu0
    %v710 = vpop.f32.mrb[0].mxu0
    %v711 = vadd.f32 %v598, %v710
    %v712 = vpop.f32.mrb[0].mxu0
    %713 = vmatprep.mubr.bf16.mxu0 0
    %714 = vmatmul.mubr.bf16.gmra.mrb[0].mxu0 %v605
    %v715 = vpop.f32.mrb[0].mxu0
    %v716 = vadd.f32 %v598, %v715
    %v717 = vpop.f32.mrb[0].mxu0
    %v718 = vpop.f32.mrb[0].mxu0
    %v719 = vadd.f32 %v598, %v718
    %v720 = vpop.f32.mrb[0].mxu0
    %721 = vmatprep.mubr.bf16.mxu0 0
    %722 = vmatmul.mubr.bf16.gmra.mrb[0].mxu0 %v608
    %v723 = vpop.f32.mrb[0].mxu0
    %v724 = vadd.f32 %v598, %v723
    %v725 = vpop.f32.mrb[0].mxu0
    %v726 = vpop.f32.mrb[0].mxu0
    %v727 = vadd.f32 %v598, %v726
    %v728 = vpop.f32.mrb[0].mxu0
    %729 = vmatprep.mubr.bf16.mxu0 0
    %730 = vmatmul.mubr.bf16.gmra.mrb[0].mxu0 %v611
    %v731 = vpop.f32.mrb[0].mxu0
    %v732 = vadd.f32 %v598, %v731
    %v733 = vpop.f32.mrb[0].mxu0
    %v734 = vpop.f32.mrb[0].mxu0
    %v735 = vadd.f32 %v598, %v734
    %v736 = vpop.f32.mrb[0].mxu0
    %737 = vmatprep.mubr.bf16.mxu0 0
    %738 = vmatmul.mubr.bf16.gmra.mrb[0].mxu0 %v614
    %v739 = vpop.f32.mrb[0].mxu0
    %v740 = vadd.f32 %v598, %v739
    %v741 = vpop.f32.mrb[0].mxu0
    %v742 = vpop.f32.mrb[0].mxu0
    %v743 = vadd.f32 %v598, %v742
    %v744 = vpop.f32.mrb[0].mxu0
    %745 = vmatprep.mubr.bf16.mxu0 0
    %746 = vmatmul.mubr.bf16.gmra.mrb[0].mxu0 %v617
    %v747 = vpop.f32.mrb[0].mxu0
    %v748 = vadd.f32 %v598, %v747
    %v749 = vpop.f32.mrb[0].mxu0
    %v750 = vpop.f32.mrb[0].mxu0
    %v751 = vadd.f32 %v598, %v750
    %v752 = vpop.f32.mrb[0].mxu0
    %753 = vmatprep.mubr.bf16.mxu0 0
    %754 = vmatmul.mubr.bf16.gmra.mrb[0].mxu0 %v620
    %v755 = vpop.f32.mrb[0].mxu0
    %v756 = vadd.f32 %v598, %v755
    %v757 = vpop.f32.mrb[0].mxu0
    %v758 = vpop.f32.mrb[0].mxu0
    %v759 = vadd.f32 %v598, %v758
    %v760 = vpop.f32.mrb[0].mxu0
    %761 = vmatprep.mubr.bf16.mxu0 0
    %762 = vmatmul.mubr.bf16.gmra.mrb[0].mxu0 %v623
    %v763 = vpop.f32.mrb[0].mxu0
    %v764 = vadd.f32 %v598, %v763
    %v765 = vpop.f32.mrb[0].mxu0
    %v766 = vpop.f32.mrb[0].mxu0
    %v767 = vadd.f32 %v598, %v766
    %v768 = vpop.f32.mrb[0].mxu0
    %769 = vmatprep.mubr.bf16.mxu0 0
    %770 = vmatmul.mubr.bf16.gmra.mrb[0].mxu0 %v626
    %v771 = vpop.f32.mrb[0].mxu0
    %v772 = vadd.f32 %v598, %v771
    %v773 = vpop.f32.mrb[0].mxu0
    %v774 = vpop.f32.mrb[0].mxu0
    %v775 = vadd.f32 %v598, %v774
    %v776 = vpop.f32.mrb[0].mxu0
    %777 = vmatprep.mubr.bf16.mxu0 0
    %778 = vmatmul.mubr.bf16.gmra.mrb[0].mxu0 %v629
    %v779 = vpop.f32.mrb[0].mxu0
    %v780 = vadd.f32 %v598, %v779
    %v781 = vpop.f32.mrb[0].mxu0
    %v782 = vpop.f32.mrb[0].mxu0
    %v783 = vadd.f32 %v598, %v782
    %v784 = vpop.f32.mrb[0].mxu0
    %785 = vmatprep.mubr.bf16.mxu0 0
    %786 = vmatmul.mubr.bf16.gmra.mrb[0].mxu0 %v632
    %v787 = vpop.f32.mrb[0].mxu0
    %v788 = vadd.f32 %v598, %v787
    %v789 = vpop.f32.mrb[0].mxu0
    %v790 = vpop.f32.mrb[0].mxu0
    %v791 = vadd.f32 %v598, %v790
    %v792 = vpop.f32.mrb[0].mxu0
    %793 = vmatprep.mubr.bf16.mxu0 0
    %794 = vmatmul.mubr.bf16.gmra.mrb[0].mxu0 %v635
    %v795 = vpop.f32.mrb[0].mxu0
    %v796 = vadd.f32 %v598, %v795
    %v797 = vpop.f32.mrb[0].mxu0
    %v798 = vpop.f32.mrb[0].mxu0
    %v799 = vadd.f32 %v598, %v798
    %v800 = vpop.f32.mrb[0].mxu0
    %801 = vmatprep.mubr.bf16.mxu0 0
    %802 = vmatmul.mubr.bf16.gmra.mrb[0].mxu0 %v638
    %v803 = vpop.f32.mrb[0].mxu0
    %v804 = vadd.f32 %v598, %v803
    %v805 = vpop.f32.mrb[0].mxu0
    %v806 = vpop.f32.mrb[0].mxu0
    %v807 = vadd.f32 %v598, %v806
    %v808 = vpop.f32.mrb[0].mxu0
    %809 = vmatprep.mubr.bf16.mxu0 0
    %810 = vmatmul.mubr.bf16.gmra.mrb[0].mxu0 %v641
    %v811 = vpop.f32.mrb[0].mxu0
    %v812 = vadd.f32 %v598, %v811
    %v813 = vpop.f32.mrb[0].mxu0
    %v814 = vpop.f32.mrb[0].mxu0
    %v815 = vadd.f32 %v598, %v814
    %v816 = vpop.f32.mrb[0].mxu0
    %817 = vmatprep.mubr.bf16.mxu0 0
    %818 = vmatmul.mubr.bf16.gmra.mrb[0].mxu0 %v644
    %v819 = vpop.f32.mrb[0].mxu0
    %v820 = vadd.f32 %v598, %v819
    %v821 = vpop.f32.mrb[0].mxu0
    %v822 = vpop.f32.mrb[0].mxu0
    %v823 = vadd.f32 %v598, %v822
    %v824 = vpop.f32.mrb[0].mxu0
    %825 = vmatprep.mubr.bf16.mxu0 0
    %826 = vmatmul.mubr.bf16.gmra.mrb[0].mxu0 %v647
    %v827 = vpop.f32.mrb[0].mxu0
    %v828 = vadd.f32 %v598, %v827
    %v829 = vpop.f32.mrb[0].mxu0
    %v830 = vpop.f32.mrb[0].mxu0
    %v831 = vadd.f32 %v598, %v830
    %v832 = vpop.f32.mrb[0].mxu0
    %833 = vmatprep.mubr.bf16.mxu0 0
    %834 = vmatmul.mubr.bf16.gmra.mrb[0].mxu0 %v650
    %v835 = vpop.f32.mrb[0].mxu0
    %v836 = vadd.f32 %v598, %v835
    %v837 = vpop.f32.mrb[0].mxu0
    %v838 = vpop.f32.mrb[0].mxu0
    %v839 = vadd.f32 %v598, %v838
    %v840 = vpop.f32.mrb[0].mxu0
    %841 = vmatprep.mubr.bf16.mxu0 0
    %842 = vmatmul.mubr.bf16.gmra.mrb[0].mxu0 %v653
    %v843 = vpop.f32.mrb[0].mxu0
    %v844 = vadd.f32 %v598, %v843
    %v845 = vpop.f32.mrb[0].mxu0
    %v846 = vpop.f32.mrb[0].mxu0
    %v847 = vadd.f32 %v598, %v846
    %v848 = vpop.f32.mrb[0].mxu0
    %849 = vmatprep.mubr.bf16.mxu0 0
    %850 = vmatmul.mubr.bf16.gmra.mrb[0].mxu0 %v656
    %v851 = vpop.f32.mrb[0].mxu0
    %v852 = vadd.f32 %v598, %v851
    %v853 = vpop.f32.mrb[0].mxu0
    %v854 = vpop.f32.mrb[0].mxu0
    %v855 = vadd.f32 %v598, %v854
    %v856 = vpop.f32.mrb[0].mxu0
    %857 = vmatprep.mubr.bf16.mxu0 0
    %858 = vmatmul.mubr.bf16.gmra.mrb[0].mxu0 %v659
    %v859 = vpop.f32.mrb[0].mxu0
    %v860 = vadd.f32 %v598, %v859
    %v861 = vpop.f32.mrb[0].mxu0
    %v862 = vpop.f32.mrb[0].mxu0
    %v863 = vadd.f32 %v598, %v862
    %v864 = vpop.f32.mrb[0].mxu0
    %865 = vmatprep.mubr.bf16.mxu0 0
    %866 = vmatmul.mubr.bf16.gmra.mrb[0].mxu0 %v662
    %v867 = vpop.f32.mrb[0].mxu0
    %v868 = vadd.f32 %v598, %v867
    %v869 = vpop.f32.mrb[0].mxu0
    %v870 = vpop.f32.mrb[0].mxu0
    %v871 = vadd.f32 %v598, %v870
    %v872 = vpop.f32.mrb[0].mxu0
    %873 = vmatprep.mubr.bf16.mxu0 0
    %874 = vmatmul.mubr.bf16.gmra.mrb[0].mxu0 %v665
    %v875 = vpop.f32.mrb[0].mxu0
    %v876 = vadd.f32 %v598, %v875
    %v877 = vpop.f32.mrb[0].mxu0
    %v878 = vpop.f32.mrb[0].mxu0
    %v879 = vadd.f32 %v598, %v878
    %v880 = vpop.f32.mrb[0].mxu0
    %881 = vmatprep.mubr.bf16.mxu0 0
    %882 = vmatmul.mubr.bf16.gmra.mrb[0].mxu0 %v668
    %v883 = vpop.f32.mrb[0].mxu0
    %v884 = vadd.f32 %v598, %v883
    %v885 = vpop.f32.mrb[0].mxu0
    %v886 = vpop.f32.mrb[0].mxu0
    %v887 = vadd.f32 %v598, %v886
    %v888 = vpop.f32.mrb[0].mxu0
    %889 = vmatprep.mubr.bf16.mxu0 0
    %890 = vmatmul.mubr.bf16.gmra.mrb[0].mxu0 %v671
    %v891 = vpop.f32.mrb[0].mxu0
    %v892 = vadd.f32 %v598, %v891
    %v893 = vpop.f32.mrb[0].mxu0
    %v894 = vpop.f32.mrb[0].mxu0
    %v895 = vadd.f32 %v598, %v894
    %v896 = vpop.f32.mrb[0].mxu0
    %897 = vdwg.mxu0
    %v898 = vpack.c.bf16 %v711, %v708
    %v899 = vpack.c.bf16 %v719, %v716
    %v900 = vpack.c.bf16 %v727, %v724
    %v901 = vpack.c.bf16 %v735, %v732
    %v902 = vpack.c.bf16 %v743, %v740
    %v903 = vpack.c.bf16 %v751, %v748
    %v904 = vpack.c.bf16 %v759, %v756
    %v905 = vpack.c.bf16 %v767, %v764
    %v906 = vld [vmem:[%s8] sm:$0xff]
    %v907 = vld [vmem:[%s8 + $0x8] sm:$0xff]
    %v908 = vld [vmem:[%s8 + $0x10] sm:$0xff]
    %v909 = vld [vmem:[%s8 + $0x18] sm:$0xff]
    %v910 = vld [vmem:[%s8 + $0x20] sm:$0xff]
    %v911 = vld [vmem:[%s8 + $0x28] sm:$0xff]
    %v912 = vld [vmem:[%s8 + $0x30] sm:$0xff]
    %v913 = vld [vmem:[%s8 + $0x38] sm:$0xff]
    %v914 = vld [vmem:[%s8 + $0x40] sm:$0xff]
    %v915 = vld [vmem:[%s8 + $0x48] sm:$0xff]
    %v916 = vld [vmem:[%s8 + $0x50] sm:$0xff]
    %v917 = vld [vmem:[%s8 + $0x58] sm:$0xff]
    %v918 = vld [vmem:[%s8 + $0x60] sm:$0xff]
    %v919 = vld [vmem:[%s8 + $0x68] sm:$0xff]
    %v920 = vld [vmem:[%s8 + $0x70] sm:$0xff]
    %v921 = vld [vmem:[%s8 + $0x78] sm:$0xff]
    %v922 = vpack.c.bf16 %v907, %v906
    %v923 = vpack.c.bf16 %v909, %v908
    %v924 = vpack.c.bf16 %v911, %v910
    %v925 = vpack.c.bf16 %v913, %v912
    %v926 = vpack.c.bf16 %v915, %v914
    %v927 = vpack.c.bf16 %v917, %v916
    %v928 = vpack.c.bf16 %v919, %v918
    %v929 = vpack.c.bf16 %v921, %v920
    %v930 = vpack.c.bf16 %v775, %v772
    %v931 = vpack.c.bf16 %v783, %v780
    %v932 = vpack.c.bf16 %v791, %v788
    %v933 = vpack.c.bf16 %v799, %v796
    %v934 = vpack.c.bf16 %v807, %v804
    %v935 = vpack.c.bf16 %v815, %v812
    %v936 = vpack.c.bf16 %v823, %v820
    %v937 = vpack.c.bf16 %v831, %v828
    %v938 = vld [vmem:[%s9] sm:$0xff]
    %v939 = vld [vmem:[%s9 + $0x8] sm:$0xff]
    %v940 = vld [vmem:[%s9 + $0x10] sm:$0xff]
    %v941 = vld [vmem:[%s9 + $0x18] sm:$0xff]
    %v942 = vld [vmem:[%s9 + $0x20] sm:$0xff]
    %v943 = vld [vmem:[%s9 + $0x28] sm:$0xff]
    %v944 = vld [vmem:[%s9 + $0x30] sm:$0xff]
    %v945 = vld [vmem:[%s9 + $0x38] sm:$0xff]
    %v946 = vld [vmem:[%s9 + $0x40] sm:$0xff]
    %v947 = vld [vmem:[%s9 + $0x48] sm:$0xff]
    %v948 = vld [vmem:[%s9 + $0x50] sm:$0xff]
    %v949 = vld [vmem:[%s9 + $0x58] sm:$0xff]
    %v950 = vld [vmem:[%s9 + $0x60] sm:$0xff]
    %v951 = vld [vmem:[%s9 + $0x68] sm:$0xff]
    %v952 = vld [vmem:[%s9 + $0x70] sm:$0xff]
    %v953 = vld [vmem:[%s9 + $0x78] sm:$0xff]
    %v954 = vpack.c.bf16 %v939, %v938
    %v955 = vpack.c.bf16 %v941, %v940
    %v956 = vpack.c.bf16 %v943, %v942
    %v957 = vpack.c.bf16 %v945, %v944
    %v958 = vpack.c.bf16 %v947, %v946
    %v959 = vpack.c.bf16 %v949, %v948
    %v960 = vpack.c.bf16 %v951, %v950
    %v961 = vpack.c.bf16 %v953, %v952
    %962 = vmatprep.subr.bf16.mxu0 0
    %963 = vmatpush1.bf16.msra.mxu0 %v954
    %964 = vmatprep.subr.bf16.mxu0 0
    %965 = vmatpush1.bf16.msra.mxu0 %v955
    %966 = vmatprep.subr.bf16.mxu0 0
    %967 = vmatpush1.bf16.msra.mxu0 %v956
    %968 = vmatprep.subr.bf16.mxu0 0
    %969 = vmatpush1.bf16.msra.mxu0 %v957
    %970 = vmatprep.subr.bf16.mxu0 0
    %971 = vmatpush1.bf16.msra.mxu0 %v958
    %972 = vmatprep.subr.bf16.mxu0 0
    %973 = vmatpush1.bf16.msra.mxu0 %v959
    %974 = vmatprep.subr.bf16.mxu0 0
    %975 = vmatpush1.bf16.msra.mxu0 %v960
    %976 = vmatprep.subr.bf16.mxu0 0
    %977 = vmatpush1.bf16.msra.mxu0 %v961
    %978 = vmatprep.subr.bf16.mxu0 0
    %979 = vmatpush1.bf16.msra.mxu0 0
    %980 = vmatprep.subr.bf16.mxu0 0
    %981 = vmatpush1.bf16.msra.mxu0 0
    %982 = vmatprep.subr.bf16.mxu0 0
    %983 = vmatpush1.bf16.msra.mxu0 0
    %984 = vmatprep.subr.bf16.mxu0 0
    %985 = vmatpush1.bf16.msra.mxu0 0
    %986 = vmatprep.subr.bf16.mxu0 0
    %987 = vmatpush1.bf16.msra.mxu0 0
    %988 = vmatprep.subr.bf16.mxu0 0
    %989 = vmatpush1.bf16.msra.mxu0 0
    %990 = vmatprep.subr.bf16.mxu0 0
    %991 = vmatpush1.bf16.msra.mxu0 0
    %992 = vmatprep.subr.bf16.mxu0 0
    %993 = vmatpush1.bf16.msra.mxu0 0
    %994 = vmatprep.mubr.bf16.mxu0 0
    %995 = vmatmul.mubr.bf16.gmra.mrb[0].mxu0 %v930
    %v996 = vpop.f32.mrb[0].mxu0
    %v997 = vadd.f32 0.0, %v996
    %v998 = vpop.f32.mrb[0].mxu0
    %v999 = vpop.f32.mrb[0].mxu0
    %v1000 = vadd.f32 0.0, %v999
    %v1001 = vpop.f32.mrb[0].mxu0
    %1002 = vmatprep.mubr.bf16.mxu0 0
    %1003 = vmatmul.mubr.bf16.gmra.mrb[0].mxu0 %v931
    %v1004 = vpop.f32.mrb[0].mxu0
    %v1005 = vadd.f32 0.0, %v1004
    %v1006 = vpop.f32.mrb[0].mxu0
    %v1007 = vpop.f32.mrb[0].mxu0
    %v1008 = vadd.f32 0.0, %v1007
    %v1009 = vpop.f32.mrb[0].mxu0
    %1010 = vmatprep.mubr.bf16.mxu0 0
    %1011 = vmatmul.mubr.bf16.gmra.mrb[0].mxu0 %v932
    %v1012 = vpop.f32.mrb[0].mxu0
    %v1013 = vadd.f32 0.0, %v1012
    %v1014 = vpop.f32.mrb[0].mxu0
    %v1015 = vpop.f32.mrb[0].mxu0
    %v1016 = vadd.f32 0.0, %v1015
    %v1017 = vpop.f32.mrb[0].mxu0
    %1018 = vmatprep.mubr.bf16.mxu0 0
    %1019 = vmatmul.mubr.bf16.gmra.mrb[0].mxu0 %v933
    %v1020 = vpop.f32.mrb[0].mxu0
    %v1021 = vadd.f32 0.0, %v1020
    %v1022 = vpop.f32.mrb[0].mxu0
    %v1023 = vpop.f32.mrb[0].mxu0
    %v1024 = vadd.f32 0.0, %v1023
    %v1025 = vpop.f32.mrb[0].mxu0
    %1026 = vmatprep.mubr.bf16.mxu0 0
    %1027 = vmatmul.mubr.bf16.gmra.mrb[0].mxu0 %v934
    %v1028 = vpop.f32.mrb[0].mxu0
    %v1029 = vadd.f32 0.0, %v1028
    %v1030 = vpop.f32.mrb[0].mxu0
    %v1031 = vpop.f32.mrb[0].mxu0
    %v1032 = vadd.f32 0.0, %v1031
    %v1033 = vpop.f32.mrb[0].mxu0
    %1034 = vmatprep.mubr.bf16.mxu0 0
    %1035 = vmatmul.mubr.bf16.gmra.mrb[0].mxu0 %v935
    %v1036 = vpop.f32.mrb[0].mxu0
    %v1037 = vadd.f32 0.0, %v1036
    %v1038 = vpop.f32.mrb[0].mxu0
    %v1039 = vpop.f32.mrb[0].mxu0
    %v1040 = vadd.f32 0.0, %v1039
    %v1041 = vpop.f32.mrb[0].mxu0
    %1042 = vmatprep.mubr.bf16.mxu0 0
    %1043 = vmatmul.mubr.bf16.gmra.mrb[0].mxu0 %v936
    %v1044 = vpop.f32.mrb[0].mxu0
    %v1045 = vadd.f32 0.0, %v1044
    %v1046 = vpop.f32.mrb[0].mxu0
    %v1047 = vpop.f32.mrb[0].mxu0
    %v1048 = vadd.f32 0.0, %v1047
    %v1049 = vpop.f32.mrb[0].mxu0
    %1050 = vmatprep.mubr.bf16.mxu0 0
    %1051 = vmatmul.mubr.bf16.gmra.mrb[0].mxu0 %v937
    %v1052 = vpop.f32.mrb[0].mxu0
    %v1053 = vadd.f32 0.0, %v1052
    %v1054 = vpop.f32.mrb[0].mxu0
    %v1055 = vpop.f32.mrb[0].mxu0
    %v1056 = vadd.f32 0.0, %v1055
    %v1057 = vpop.f32.mrb[0].mxu0
    %1058 = vdwg.mxu0
    %1059 = vmatprep.subr.bf16.mxu0 0
    %1060 = vmatpush1.bf16.msra.mxu0 %v922
    %1061 = vmatprep.subr.bf16.mxu0 0
    %1062 = vmatpush1.bf16.msra.mxu0 %v923
    %1063 = vmatprep.subr.bf16.mxu0 0
    %1064 = vmatpush1.bf16.msra.mxu0 %v924
    %1065 = vmatprep.subr.bf16.mxu0 0
    %1066 = vmatpush1.bf16.msra.mxu0 %v925
    %1067 = vmatprep.subr.bf16.mxu0 0
    %1068 = vmatpush1.bf16.msra.mxu0 %v926
    %1069 = vmatprep.subr.bf16.mxu0 0
    %1070 = vmatpush1.bf16.msra.mxu0 %v927
    %1071 = vmatprep.subr.bf16.mxu0 0
    %1072 = vmatpush1.bf16.msra.mxu0 %v928
    %1073 = vmatprep.subr.bf16.mxu0 0
    %1074 = vmatpush1.bf16.msra.mxu0 %v929
    %1075 = vmatprep.subr.bf16.mxu0 0
    %1076 = vmatpush1.bf16.msra.mxu0 0
    %1077 = vmatprep.subr.bf16.mxu0 0
    %1078 = vmatpush1.bf16.msra.mxu0 0
    %1079 = vmatprep.subr.bf16.mxu0 0
    %1080 = vmatpush1.bf16.msra.mxu0 0
    %1081 = vmatprep.subr.bf16.mxu0 0
    %1082 = vmatpush1.bf16.msra.mxu0 0
    %1083 = vmatprep.subr.bf16.mxu0 0
    %1084 = vmatpush1.bf16.msra.mxu0 0
    %1085 = vmatprep.subr.bf16.mxu0 0
    %1086 = vmatpush1.bf16.msra.mxu0 0
    %1087 = vmatprep.subr.bf16.mxu0 0
    %1088 = vmatpush1.bf16.msra.mxu0 0
    %1089 = vmatprep.subr.bf16.mxu0 0
    %1090 = vmatpush1.bf16.msra.mxu0 0
    %1091 = vmatprep.mubr.bf16.mxu0 0
    %1092 = vmatmul.mubr.bf16.gmra.mrb[0].mxu0 %v898
    %v1093 = vpop.f32.mrb[0].mxu0
    %v1094 = vadd.f32 %v997, %v1093
    %v1095 = vpop.f32.mrb[0].mxu0
    %v1096 = vpop.f32.mrb[0].mxu0
    %v1097 = vadd.f32 %v1000, %v1096
    %v1098 = vpop.f32.mrb[0].mxu0
    %1099 = vmatprep.mubr.bf16.mxu0 0
    %1100 = vmatmul.mubr.bf16.gmra.mrb[0].mxu0 %v899
    %v1101 = vpop.f32.mrb[0].mxu0
    %v1102 = vadd.f32 %v1005, %v1101
    %v1103 = vpop.f32.mrb[0].mxu0
    %v1104 = vpop.f32.mrb[0].mxu0
    %v1105 = vadd.f32 %v1008, %v1104
    %v1106 = vpop.f32.mrb[0].mxu0
    %1107 = vmatprep.mubr.bf16.mxu0 0
    %1108 = vmatmul.mubr.bf16.gmra.mrb[0].mxu0 %v900
    %v1109 = vpop.f32.mrb[0].mxu0
    %v1110 = vadd.f32 %v1013, %v1109
    %v1111 = vpop.f32.mrb[0].mxu0
    %v1112 = vpop.f32.mrb[0].mxu0
    %v1113 = vadd.f32 %v1016, %v1112
    %v1114 = vpop.f32.mrb[0].mxu0
    %1115 = vmatprep.mubr.bf16.mxu0 0
    %1116 = vmatmul.mubr.bf16.gmra.mrb[0].mxu0 %v901
    %v1117 = vpop.f32.mrb[0].mxu0
    %v1118 = vadd.f32 %v1021, %v1117
    %v1119 = vpop.f32.mrb[0].mxu0
    %v1120 = vpop.f32.mrb[0].mxu0
    %v1121 = vadd.f32 %v1024, %v1120
    %v1122 = vpop.f32.mrb[0].mxu0
    %1123 = vmatprep.mubr.bf16.mxu0 0
    %1124 = vmatmul.mubr.bf16.gmra.mrb[0].mxu0 %v902
    %v1125 = vpop.f32.mrb[0].mxu0
    %v1126 = vadd.f32 %v1029, %v1125
    %v1127 = vpop.f32.mrb[0].mxu0
    %v1128 = vpop.f32.mrb[0].mxu0
    %v1129 = vadd.f32 %v1032, %v1128
    %v1130 = vpop.f32.mrb[0].mxu0
    %1131 = vmatprep.mubr.bf16.mxu0 0
    %1132 = vmatmul.mubr.bf16.gmra.mrb[0].mxu0 %v903
    %v1133 = vpop.f32.mrb[0].mxu0
    %v1134 = vadd.f32 %v1037, %v1133
    %v1135 = vpop.f32.mrb[0].mxu0
    %v1136 = vpop.f32.mrb[0].mxu0
    %v1137 = vadd.f32 %v1040, %v1136
    %v1138 = vpop.f32.mrb[0].mxu0
    %1139 = vmatprep.mubr.bf16.mxu0 0
    %1140 = vmatmul.mubr.bf16.gmra.mrb[0].mxu0 %v904
    %v1141 = vpop.f32.mrb[0].mxu0
    %v1142 = vadd.f32 %v1045, %v1141
    %v1143 = vpop.f32.mrb[0].mxu0
    %v1144 = vpop.f32.mrb[0].mxu0
    %v1145 = vadd.f32 %v1048, %v1144
    %v1146 = vpop.f32.mrb[0].mxu0
    %1147 = vmatprep.mubr.bf16.mxu0 0
    %1148 = vmatmul.mubr.bf16.gmra.mrb[0].mxu0 %v905
    %v1149 = vpop.f32.mrb[0].mxu0
    %v1150 = vadd.f32 %v1053, %v1149
    %v1151 = vpop.f32.mrb[0].mxu0
    %v1152 = vpop.f32.mrb[0].mxu0
    %v1153 = vadd.f32 %v1056, %v1152
    %v1154 = vpop.f32.mrb[0].mxu0
    %1155 = vdwg.mxu0
    %v1156 = vld [vmem:[%s10] sm:$0x1]
    %v1158 = vlaneseq
    %v1159 = vshrl.u32 %v1158, 7
    %v1160 = vsub.s32 0, %v1159
    %v1161 = vrot.slane %v1156, %v1160
    %v1163 = vadd.f32 %v1094, %v1161
    %v1164 = vadd.f32 %v1097, %v1161
    %v1165 = vadd.f32 %v1102, %v1161
    %v1166 = vadd.f32 %v1105, %v1161
    %v1167 = vadd.f32 %v1110, %v1161
    %v1168 = vadd.f32 %v1113, %v1161
    %v1169 = vadd.f32 %v1118, %v1161
    %v1170 = vadd.f32 %v1121, %v1161
    %v1171 = vadd.f32 %v1126, %v1161
    %v1172 = vadd.f32 %v1129, %v1161
    %v1173 = vadd.f32 %v1134, %v1161
    %v1174 = vadd.f32 %v1137, %v1161
    %v1175 = vadd.f32 %v1142, %v1161
    %v1176 = vadd.f32 %v1145, %v1161
    %v1177 = vadd.f32 %v1150, %v1161
    %v1178 = vadd.f32 %v1153, %v1161
    %v1179 = vpack.c.bf16 %v839, %v836
    %v1180 = vpack.c.bf16 %v847, %v844
    %v1181 = vpack.c.bf16 %v855, %v852
    %v1182 = vpack.c.bf16 %v863, %v860
    %v1183 = vpack.c.bf16 %v871, %v868
    %v1184 = vpack.c.bf16 %v879, %v876
    %v1185 = vpack.c.bf16 %v887, %v884
    %v1186 = vpack.c.bf16 %v895, %v892
    %v1187 = vld [vmem:[%s11] sm:$0xff]
    %v1188 = vld [vmem:[%s11 + $0x8] sm:$0xff]
    %v1189 = vld [vmem:[%s11 + $0x10] sm:$0xff]
    %v1190 = vld [vmem:[%s11 + $0x18] sm:$0xff]
    %v1191 = vld [vmem:[%s11 + $0x20] sm:$0xff]
    %v1192 = vld [vmem:[%s11 + $0x28] sm:$0xff]
    %v1193 = vld [vmem:[%s11 + $0x30] sm:$0xff]
    %v1194 = vld [vmem:[%s11 + $0x38] sm:$0xff]
    %v1195 = vld [vmem:[%s11 + $0x40] sm:$0xff]
    %v1196 = vld [vmem:[%s11 + $0x48] sm:$0xff]
    %v1197 = vld [vmem:[%s11 + $0x50] sm:$0xff]
    %v1198 = vld [vmem:[%s11 + $0x58] sm:$0xff]
    %v1199 = vld [vmem:[%s11 + $0x60] sm:$0xff]
    %v1200 = vld [vmem:[%s11 + $0x68] sm:$0xff]
    %v1201 = vld [vmem:[%s11 + $0x70] sm:$0xff]
    %v1202 = vld [vmem:[%s11 + $0x78] sm:$0xff]
    %v1203 = vpack.c.bf16 %v1188, %v1187
    %v1204 = vpack.c.bf16 %v1190, %v1189
    %v1205 = vpack.c.bf16 %v1192, %v1191
    %v1206 = vpack.c.bf16 %v1194, %v1193
    %v1207 = vpack.c.bf16 %v1196, %v1195
    %v1208 = vpack.c.bf16 %v1198, %v1197
    %v1209 = vpack.c.bf16 %v1200, %v1199
    %v1210 = vpack.c.bf16 %v1202, %v1201
    %v1211 = vld [vmem:[%s12] sm:$0x1]
    %v1213 = vlaneseq
    %v1214 = vshrl.u32 %v1213, 7
    %v1215 = vsub.s32 0, %v1214
    %v1216 = vrot.slane %v1211, %v1215
    %1218 = vmatprep.subr.bf16.mxu0 0
    %1219 = vmatpush1.bf16.msra.mxu0 %v1203
    %1220 = vmatprep.subr.bf16.mxu0 0
    %1221 = vmatpush1.bf16.msra.mxu0 %v1204
    %1222 = vmatprep.subr.bf16.mxu0 0
    %1223 = vmatpush1.bf16.msra.mxu0 %v1205
    %1224 = vmatprep.subr.bf16.mxu0 0
    %1225 = vmatpush1.bf16.msra.mxu0 %v1206
    %1226 = vmatprep.subr.bf16.mxu0 0
    %1227 = vmatpush1.bf16.msra.mxu0 %v1207
    %1228 = vmatprep.subr.bf16.mxu0 0
    %1229 = vmatpush1.bf16.msra.mxu0 %v1208
    %1230 = vmatprep.subr.bf16.mxu0 0
    %1231 = vmatpush1.bf16.msra.mxu0 %v1209
    %1232 = vmatprep.subr.bf16.mxu0 0
    %1233 = vmatpush1.bf16.msra.mxu0 %v1210
    %1234 = vmatprep.subr.bf16.mxu0 0
    %1235 = vmatpush1.bf16.msra.mxu0 0
    %1236 = vmatprep.subr.bf16.mxu0 0
    %1237 = vmatpush1.bf16.msra.mxu0 0
    %1238 = vmatprep.subr.bf16.mxu0 0
    %1239 = vmatpush1.bf16.msra.mxu0 0
    %1240 = vmatprep.subr.bf16.mxu0 0
    %1241 = vmatpush1.bf16.msra.mxu0 0
    %1242 = vmatprep.subr.bf16.mxu0 0
    %1243 = vmatpush1.bf16.msra.mxu0 0
    %1244 = vmatprep.subr.bf16.mxu0 0
    %1245 = vmatpush1.bf16.msra.mxu0 0
    %1246 = vmatprep.subr.bf16.mxu0 0
    %1247 = vmatpush1.bf16.msra.mxu0 0
    %1248 = vmatprep.subr.bf16.mxu0 0
    %1249 = vmatpush1.bf16.msra.mxu0 0
    %1250 = vmatprep.mubr.bf16.mxu0 0
    %1251 = vmatmul.mubr.bf16.gmra.mrb[0].mxu0 %v1179
    %v1252 = vpop.f32.mrb[0].mxu0
    %v1253 = vadd.f32 %v1216, %v1252
    %v1254 = vpop.f32.mrb[0].mxu0
    %v1255 = vpop.f32.mrb[0].mxu0
    %v1256 = vadd.f32 %v1216, %v1255
    %v1257 = vpop.f32.mrb[0].mxu0
    %1258 = vmatprep.mubr.bf16.mxu0 0
    %1259 = vmatmul.mubr.bf16.gmra.mrb[0].mxu0 %v1180
    %v1260 = vpop.f32.mrb[0].mxu0
    %v1261 = vadd.f32 %v1216, %v1260
    %v1262 = vpop.f32.mrb[0].mxu0
    %v1263 = vpop.f32.mrb[0].mxu0
    %v1264 = vadd.f32 %v1216, %v1263
    %v1265 = vpop.f32.mrb[0].mxu0
    %1266 = vmatprep.mubr.bf16.mxu0 0
    %1267 = vmatmul.mubr.bf16.gmra.mrb[0].mxu0 %v1181
    %v1268 = vpop.f32.mrb[0].mxu0
    %v1269 = vadd.f32 %v1216, %v1268
    %v1270 = vpop.f32.mrb[0].mxu0
    %v1271 = vpop.f32.mrb[0].mxu0
    %v1272 = vadd.f32 %v1216, %v1271
    %v1273 = vpop.f32.mrb[0].mxu0
    %1274 = vmatprep.mubr.bf16.mxu0 0
    %1275 = vmatmul.mubr.bf16.gmra.mrb[0].mxu0 %v1182
    %v1276 = vpop.f32.mrb[0].mxu0
    %v1277 = vadd.f32 %v1216, %v1276
    %v1278 = vpop.f32.mrb[0].mxu0
    %v1279 = vpop.f32.mrb[0].mxu0
    %v1280 = vadd.f32 %v1216, %v1279
    %v1281 = vpop.f32.mrb[0].mxu0
    %1282 = vmatprep.mubr.bf16.mxu0 0
    %1283 = vmatmul.mubr.bf16.gmra.mrb[0].mxu0 %v1183
    %v1284 = vpop.f32.mrb[0].mxu0
    %v1285 = vadd.f32 %v1216, %v1284
    %v1286 = vpop.f32.mrb[0].mxu0
    %v1287 = vpop.f32.mrb[0].mxu0
    %v1288 = vadd.f32 %v1216, %v1287
    %v1289 = vpop.f32.mrb[0].mxu0
    %1290 = vmatprep.mubr.bf16.mxu0 0
    %1291 = vmatmul.mubr.bf16.gmra.mrb[0].mxu0 %v1184
    %v1292 = vpop.f32.mrb[0].mxu0
    %v1293 = vadd.f32 %v1216, %v1292
    %v1294 = vpop.f32.mrb[0].mxu0
    %v1295 = vpop.f32.mrb[0].mxu0
    %v1296 = vadd.f32 %v1216, %v1295
    %v1297 = vpop.f32.mrb[0].mxu0
    %1298 = vmatprep.mubr.bf16.mxu0 0
    %1299 = vmatmul.mubr.bf16.gmra.mrb[0].mxu0 %v1185
    %v1300 = vpop.f32.mrb[0].mxu0
    %v1301 = vadd.f32 %v1216, %v1300
    %v1302 = vpop.f32.mrb[0].mxu0
    %v1303 = vpop.f32.mrb[0].mxu0
    %v1304 = vadd.f32 %v1216, %v1303
    %v1305 = vpop.f32.mrb[0].mxu0
    %1306 = vmatprep.mubr.bf16.mxu0 0
    %1307 = vmatmul.mubr.bf16.gmra.mrb[0].mxu0 %v1186
    %v1308 = vpop.f32.mrb[0].mxu0
    %v1309 = vadd.f32 %v1216, %v1308
    %v1310 = vpop.f32.mrb[0].mxu0
    %v1311 = vpop.f32.mrb[0].mxu0
    %v1312 = vadd.f32 %v1216, %v1311
    %v1313 = vpop.f32.mrb[0].mxu0
    %1314 = vdwg.mxu0
    %v1315 = vld [vmem:[%s13] sm:$0x1]
    %v1317 = vlaneseq
    %v1318 = vshrl.u32 %v1317, 7
    %v1319 = vsub.s32 0, %v1318
    %v1320 = vrot.slane %v1315, %v1319
    %v1322 = vmul.f32 %v335, %v1320
    %v1323 = vmul.f32 %v338, %v1320
    %v1324 = vmul.f32 %v343, %v1320
    %v1325 = vmul.f32 %v346, %v1320
    %v1326 = vmul.f32 %v351, %v1320
    %v1327 = vmul.f32 %v354, %v1320
    %v1328 = vmul.f32 %v359, %v1320
    %v1329 = vmul.f32 %v362, %v1320
    %v1330 = vmul.f32 %v367, %v1320
    %v1331 = vmul.f32 %v370, %v1320
    %v1332 = vmul.f32 %v375, %v1320
    %v1333 = vmul.f32 %v378, %v1320
    %v1334 = vmul.f32 %v383, %v1320
    %v1335 = vmul.f32 %v386, %v1320
    %v1336 = vmul.f32 %v391, %v1320
    %v1337 = vmul.f32 %v394, %v1320
    %v1338 = vsel %vm403, %v1322, 0.0
    %1339 = vadd.xlane.f32.xlu0 %v1338
    %v1340 = vpop.xlane.xlu0 %1339
    %v1341 = vsel %vm403, %v1323, 0.0
    %1342 = vadd.xlane.f32.xlu0 %v1341
    %v1343 = vpop.xlane.xlu0 %1342
    %v1344 = vsel %vm403, %v1324, 0.0
    %1345 = vadd.xlane.f32.xlu0 %v1344
    %v1346 = vpop.xlane.xlu0 %1345
    %v1347 = vsel %vm403, %v1325, 0.0
    %1348 = vadd.xlane.f32.xlu0 %v1347
    %v1349 = vpop.xlane.xlu0 %1348
    %v1350 = vsel %vm403, %v1326, 0.0
    %1351 = vadd.xlane.f32.xlu0 %v1350
    %v1352 = vpop.xlane.xlu0 %1351
    %v1353 = vsel %vm403, %v1327, 0.0
    %1354 = vadd.xlane.f32.xlu0 %v1353
    %v1355 = vpop.xlane.xlu0 %1354
    %v1356 = vsel %vm403, %v1328, 0.0
    %1357 = vadd.xlane.f32.xlu0 %v1356
    %v1358 = vpop.xlane.xlu0 %1357
    %v1359 = vsel %vm403, %v1329, 0.0
    %1360 = vadd.xlane.f32.xlu0 %v1359
    %v1361 = vpop.xlane.xlu0 %1360
    %v1362 = vsel %vm403, %v1330, 0.0
    %1363 = vadd.xlane.f32.xlu0 %v1362
    %v1364 = vpop.xlane.xlu0 %1363
    %v1365 = vsel %vm403, %v1331, 0.0
    %1366 = vadd.xlane.f32.xlu0 %v1365
    %v1367 = vpop.xlane.xlu0 %1366
    %v1368 = vsel %vm403, %v1332, 0.0
    %1369 = vadd.xlane.f32.xlu0 %v1368
    %v1370 = vpop.xlane.xlu0 %1369
    %v1371 = vsel %vm403, %v1333, 0.0
    %1372 = vadd.xlane.f32.xlu0 %v1371
    %v1373 = vpop.xlane.xlu0 %1372
    %v1374 = vsel %vm403, %v1334, 0.0
    %1375 = vadd.xlane.f32.xlu0 %v1374
    %v1376 = vpop.xlane.xlu0 %1375
    %v1377 = vsel %vm403, %v1335, 0.0
    %1378 = vadd.xlane.f32.xlu0 %v1377
    %v1379 = vpop.xlane.xlu0 %1378
    %v1380 = vsel %vm403, %v1336, 0.0
    %1381 = vadd.xlane.f32.xlu0 %v1380
    %v1382 = vpop.xlane.xlu0 %1381
    %v1383 = vsel %vm403, %v1337, 0.0
    %1384 = vadd.xlane.f32.xlu0 %v1383
    %v1385 = vpop.xlane.xlu0 %1384
    %v1386 = vld [vmem:[%s14] sm:$0x1]
    %v1388 = vlaneseq
    %v1389 = vshrl.u32 %v1388, 7
    %v1390 = vsub.s32 0, %v1389
    %v1391 = vrot.slane %v1386, %v1390
    %v1393 = vmul.f32 %v1253, %v1391
    %v1394 = vmul.f32 %v1256, %v1391
    %v1395 = vmul.f32 %v1261, %v1391
    %v1396 = vmul.f32 %v1264, %v1391
    %v1397 = vmul.f32 %v1269, %v1391
    %v1398 = vmul.f32 %v1272, %v1391
    %v1399 = vmul.f32 %v1277, %v1391
    %v1400 = vmul.f32 %v1280, %v1391
    %v1401 = vmul.f32 %v1285, %v1391
    %v1402 = vmul.f32 %v1288, %v1391
    %v1403 = vmul.f32 %v1293, %v1391
    %v1404 = vmul.f32 %v1296, %v1391
    %v1405 = vmul.f32 %v1301, %v1391
    %v1406 = vmul.f32 %v1304, %v1391
    %v1407 = vmul.f32 %v1309, %v1391
    %v1408 = vmul.f32 %v1312, %v1391
    %v1409 = vsel %vm403, %v1393, 0.0
    %1410 = vadd.xlane.f32.xlu0 %v1409
    %v1411 = vpop.xlane.xlu0 %1410
    %v1412 = vsel %vm403, %v1394, 0.0
    %1413 = vadd.xlane.f32.xlu0 %v1412
    %v1414 = vpop.xlane.xlu0 %1413
    %v1415 = vsel %vm403, %v1395, 0.0
    %1416 = vadd.xlane.f32.xlu0 %v1415
    %v1417 = vpop.xlane.xlu0 %1416
    %v1418 = vsel %vm403, %v1396, 0.0
    %1419 = vadd.xlane.f32.xlu0 %v1418
    %v1420 = vpop.xlane.xlu0 %1419
    %v1421 = vsel %vm403, %v1397, 0.0
    %1422 = vadd.xlane.f32.xlu0 %v1421
    %v1423 = vpop.xlane.xlu0 %1422
    %v1424 = vsel %vm403, %v1398, 0.0
    %1425 = vadd.xlane.f32.xlu0 %v1424
    %v1426 = vpop.xlane.xlu0 %1425
    %v1427 = vsel %vm403, %v1399, 0.0
    %1428 = vadd.xlane.f32.xlu0 %v1427
    %v1429 = vpop.xlane.xlu0 %1428
    %v1430 = vsel %vm403, %v1400, 0.0
    %1431 = vadd.xlane.f32.xlu0 %v1430
    %v1432 = vpop.xlane.xlu0 %1431
    %v1433 = vsel %vm403, %v1401, 0.0
    %1434 = vadd.xlane.f32.xlu0 %v1433
    %v1435 = vpop.xlane.xlu0 %1434
    %v1436 = vsel %vm403, %v1402, 0.0
    %1437 = vadd.xlane.f32.xlu0 %v1436
    %v1438 = vpop.xlane.xlu0 %1437
    %v1439 = vsel %vm403, %v1403, 0.0
    %1440 = vadd.xlane.f32.xlu0 %v1439
    %v1441 = vpop.xlane.xlu0 %1440
    %v1442 = vsel %vm403, %v1404, 0.0
    %1443 = vadd.xlane.f32.xlu0 %v1442
    %v1444 = vpop.xlane.xlu0 %1443
    %v1445 = vsel %vm403, %v1405, 0.0
    %1446 = vadd.xlane.f32.xlu0 %v1445
    %v1447 = vpop.xlane.xlu0 %1446
    %v1448 = vsel %vm403, %v1406, 0.0
    %1449 = vadd.xlane.f32.xlu0 %v1448
    %v1450 = vpop.xlane.xlu0 %1449
    %v1451 = vsel %vm403, %v1407, 0.0
    %1452 = vadd.xlane.f32.xlu0 %v1451
    %v1453 = vpop.xlane.xlu0 %1452
    %v1454 = vsel %vm403, %v1408, 0.0
    %1455 = vadd.xlane.f32.xlu0 %v1454
    %v1456 = vpop.xlane.xlu0 %1455
    %v1457 = vadd.f32 %v1340, %v1411
    %v1458 = vadd.f32 %v1343, %v1414
    %v1459 = vadd.f32 %v1346, %v1417
    %v1460 = vadd.f32 %v1349, %v1420
    %v1461 = vadd.f32 %v1352, %v1423
    %v1462 = vadd.f32 %v1355, %v1426
    %v1463 = vadd.f32 %v1358, %v1429
    %v1464 = vadd.f32 %v1361, %v1432
    %v1465 = vadd.f32 %v1364, %v1435
    %v1466 = vadd.f32 %v1367, %v1438
    %v1467 = vadd.f32 %v1370, %v1441
    %v1468 = vadd.f32 %v1373, %v1444
    %v1469 = vadd.f32 %v1376, %v1447
    %v1470 = vadd.f32 %v1379, %v1450
    %v1471 = vadd.f32 %v1382, %v1453
    %v1472 = vadd.f32 %v1385, %v1456
    %v1473 = vld [vmem:[%s15] sm:$0x1]
    %v1475 = vlaneseq
    %v1476 = vshrl.u32 %v1475, 7
    %v1477 = vsub.s32 0, %v1476
    %v1478 = vrot.slane %v1473, %v1477
    %v1480 = vmul.f32 %v1163, %v1478
    %v1481 = vmul.f32 %v1164, %v1478
    %v1482 = vmul.f32 %v1165, %v1478
    %v1483 = vmul.f32 %v1166, %v1478
    %v1484 = vmul.f32 %v1167, %v1478
    %v1485 = vmul.f32 %v1168, %v1478
    %v1486 = vmul.f32 %v1169, %v1478
    %v1487 = vmul.f32 %v1170, %v1478
    %v1488 = vmul.f32 %v1171, %v1478
    %v1489 = vmul.f32 %v1172, %v1478
    %v1490 = vmul.f32 %v1173, %v1478
    %v1491 = vmul.f32 %v1174, %v1478
    %v1492 = vmul.f32 %v1175, %v1478
    %v1493 = vmul.f32 %v1176, %v1478
    %v1494 = vmul.f32 %v1177, %v1478
    %v1495 = vmul.f32 %v1178, %v1478
    %v1496 = vsel %vm600, %v1480, 0.0
    %1497 = vadd.xlane.f32.xlu0 %v1496
    %v1498 = vpop.xlane.xlu0 %1497
    %v1499 = vsel %vm600, %v1481, 0.0
    %1500 = vadd.xlane.f32.xlu0 %v1499
    %v1501 = vpop.xlane.xlu0 %1500
    %v1502 = vsel %vm600, %v1482, 0.0
    %1503 = vadd.xlane.f32.xlu0 %v1502
    %v1504 = vpop.xlane.xlu0 %1503
    %v1505 = vsel %vm600, %v1483, 0.0
    %1506 = vadd.xlane.f32.xlu0 %v1505
    %v1507 = vpop.xlane.xlu0 %1506
    %v1508 = vsel %vm600, %v1484, 0.0
    %1509 = vadd.xlane.f32.xlu0 %v1508
    %v1510 = vpop.xlane.xlu0 %1509
    %v1511 = vsel %vm600, %v1485, 0.0
    %1512 = vadd.xlane.f32.xlu0 %v1511
    %v1513 = vpop.xlane.xlu0 %1512
    %v1514 = vsel %vm600, %v1486, 0.0
    %1515 = vadd.xlane.f32.xlu0 %v1514
    %v1516 = vpop.xlane.xlu0 %1515
    %v1517 = vsel %vm600, %v1487, 0.0
    %1518 = vadd.xlane.f32.xlu0 %v1517
    %v1519 = vpop.xlane.xlu0 %1518
    %v1520 = vsel %vm600, %v1488, 0.0
    %1521 = vadd.xlane.f32.xlu0 %v1520
    %v1522 = vpop.xlane.xlu0 %1521
    %v1523 = vsel %vm600, %v1489, 0.0
    %1524 = vadd.xlane.f32.xlu0 %v1523
    %v1525 = vpop.xlane.xlu0 %1524
    %v1526 = vsel %vm600, %v1490, 0.0
    %1527 = vadd.xlane.f32.xlu0 %v1526
    %v1528 = vpop.xlane.xlu0 %1527
    %v1529 = vsel %vm600, %v1491, 0.0
    %1530 = vadd.xlane.f32.xlu0 %v1529
    %v1531 = vpop.xlane.xlu0 %1530
    %v1532 = vsel %vm600, %v1492, 0.0
    %1533 = vadd.xlane.f32.xlu0 %v1532
    %v1534 = vpop.xlane.xlu0 %1533
    %v1535 = vsel %vm600, %v1493, 0.0
    %1536 = vadd.xlane.f32.xlu0 %v1535
    %v1537 = vpop.xlane.xlu0 %1536
    %v1538 = vsel %vm600, %v1494, 0.0
    %1539 = vadd.xlane.f32.xlu0 %v1538
    %v1540 = vpop.xlane.xlu0 %1539
    %v1541 = vsel %vm600, %v1495, 0.0
    %1542 = vadd.xlane.f32.xlu0 %v1541
    %v1543 = vpop.xlane.xlu0 %1542
    %v1544 = vadd.f32 %v1457, %v1498
    %v1545 = vadd.f32 %v1458, %v1501
    %v1546 = vadd.f32 %v1459, %v1504
    %v1547 = vadd.f32 %v1460, %v1507
    %v1548 = vadd.f32 %v1461, %v1510
    %v1549 = vadd.f32 %v1462, %v1513
    %v1550 = vadd.f32 %v1463, %v1516
    %v1551 = vadd.f32 %v1464, %v1519
    %v1552 = vadd.f32 %v1465, %v1522
    %v1553 = vadd.f32 %v1466, %v1525
    %v1554 = vadd.f32 %v1467, %v1528
    %v1555 = vadd.f32 %v1468, %v1531
    %v1556 = vadd.f32 %v1469, %v1534
    %v1557 = vadd.f32 %v1470, %v1537
    %v1558 = vadd.f32 %v1471, %v1540
    %v1559 = vadd.f32 %v1472, %v1543
    %v1560 = vld [vmem:[#allocation2] sm:$0x1]
    %v1562 = vlaneseq
    %v1563 = vshrl.u32 %v1562, 7
    %v1564 = vsub.s32 0, %v1563
    %v1565 = vrot.slane %v1560, %v1564
    %v1567 = vadd.f32 %v1544, %v1565
    %v1568 = vadd.f32 %v1545, %v1565
    %v1569 = vadd.f32 %v1546, %v1565
    %v1570 = vadd.f32 %v1547, %v1565
    %v1571 = vadd.f32 %v1548, %v1565
    %v1572 = vadd.f32 %v1549, %v1565
    %v1573 = vadd.f32 %v1550, %v1565
    %v1574 = vadd.f32 %v1551, %v1565
    %v1575 = vadd.f32 %v1552, %v1565
    %v1576 = vadd.f32 %v1553, %v1565
    %v1577 = vadd.f32 %v1554, %v1565
    %v1578 = vadd.f32 %v1555, %v1565
    %v1579 = vadd.f32 %v1556, %v1565
    %v1580 = vadd.f32 %v1557, %v1565
    %v1581 = vadd.f32 %v1558, %v1565
    %v1582 = vadd.f32 %v1559, %v1565
    %v1583 = vxor.u32 %v1567, 2147483648
    %v1584 = vxor.u32 %v1568, 2147483648
    %v1585 = vxor.u32 %v1569, 2147483648
    %v1586 = vxor.u32 %v1570, 2147483648
    %v1587 = vxor.u32 %v1571, 2147483648
    %v1588 = vxor.u32 %v1572, 2147483648
    %v1589 = vxor.u32 %v1573, 2147483648
    %v1590 = vxor.u32 %v1574, 2147483648
    %v1591 = vxor.u32 %v1575, 2147483648
    %v1592 = vxor.u32 %v1576, 2147483648
    %v1593 = vxor.u32 %v1577, 2147483648
    %v1594 = vxor.u32 %v1578, 2147483648
    %v1595 = vxor.u32 %v1579, 2147483648
    %v1596 = vxor.u32 %v1580, 2147483648
    %v1597 = vxor.u32 %v1581, 2147483648
    %v1598 = vxor.u32 %v1582, 2147483648
    %v1599 = vmul.f32 %v1583, 1.442695
    %v1600 = vpow.pop %v1599
    %v1601 = vmul.f32 %v1584, 1.442695
    %v1602 = vpow.pop %v1601
    %v1603 = vmul.f32 %v1585, 1.442695
    %v1604 = vpow.pop %v1603
    %v1605 = vmul.f32 %v1586, 1.442695
    %v1606 = vpow.pop %v1605
    %v1607 = vmul.f32 %v1587, 1.442695
    %v1608 = vpow.pop %v1607
    %v1609 = vmul.f32 %v1588, 1.442695
    %v1610 = vpow.pop %v1609
    %v1611 = vmul.f32 %v1589, 1.442695
    %v1612 = vpow.pop %v1611
    %v1613 = vmul.f32 %v1590, 1.442695
    %v1614 = vpow.pop %v1613
    %v1615 = vmul.f32 %v1591, 1.442695
    %v1616 = vpow.pop %v1615
    %v1617 = vmul.f32 %v1592, 1.442695
    %v1618 = vpow.pop %v1617
    %v1619 = vmul.f32 %v1593, 1.442695
    %v1620 = vpow.pop %v1619
    %v1621 = vmul.f32 %v1594, 1.442695
    %v1622 = vpow.pop %v1621
    %v1623 = vmul.f32 %v1595, 1.442695
    %v1624 = vpow.pop %v1623
    %v1625 = vmul.f32 %v1596, 1.442695
    %v1626 = vpow.pop %v1625
    %v1627 = vmul.f32 %v1597, 1.442695
    %v1628 = vpow.pop %v1627
    %v1629 = vmul.f32 %v1598, 1.442695
    %v1630 = vpow.pop %v1629
    %v1631 = vadd.f32 %v1600, 1.0
    %v1632 = vadd.f32 %v1602, 1.0
    %v1633 = vadd.f32 %v1604, 1.0
    %v1634 = vadd.f32 %v1606, 1.0
    %v1635 = vadd.f32 %v1608, 1.0
    %v1636 = vadd.f32 %v1610, 1.0
    %v1637 = vadd.f32 %v1612, 1.0
    %v1638 = vadd.f32 %v1614, 1.0
    %v1639 = vadd.f32 %v1616, 1.0
    %v1640 = vadd.f32 %v1618, 1.0
    %v1641 = vadd.f32 %v1620, 1.0
    %v1642 = vadd.f32 %v1622, 1.0
    %v1643 = vadd.f32 %v1624, 1.0
    %v1644 = vadd.f32 %v1626, 1.0
    %v1645 = vadd.f32 %v1628, 1.0
    %v1646 = vadd.f32 %v1630, 1.0
    %v1647 = vrcp.pop %v1631
    %v1648 = vmul.f32 1.0, %v1647
    %v1649 = vrcp.pop %v1632
    %v1650 = vmul.f32 1.0, %v1649
    %v1651 = vrcp.pop %v1633
    %v1652 = vmul.f32 1.0, %v1651
    %v1653 = vrcp.pop %v1634
    %v1654 = vmul.f32 1.0, %v1653
    %v1655 = vrcp.pop %v1635
    %v1656 = vmul.f32 1.0, %v1655
    %v1657 = vrcp.pop %v1636
    %v1658 = vmul.f32 1.0, %v1657
    %v1659 = vrcp.pop %v1637
    %v1660 = vmul.f32 1.0, %v1659
    %v1661 = vrcp.pop %v1638
    %v1662 = vmul.f32 1.0, %v1661
    %v1663 = vrcp.pop %v1639
    %v1664 = vmul.f32 1.0, %v1663
    %v1665 = vrcp.pop %v1640
    %v1666 = vmul.f32 1.0, %v1665
    %v1667 = vrcp.pop %v1641
    %v1668 = vmul.f32 1.0, %v1667
    %v1669 = vrcp.pop %v1642
    %v1670 = vmul.f32 1.0, %v1669
    %v1671 = vrcp.pop %v1643
    %v1672 = vmul.f32 1.0, %v1671
    %v1673 = vrcp.pop %v1644
    %v1674 = vmul.f32 1.0, %v1673
    %v1675 = vrcp.pop %v1645
    %v1676 = vmul.f32 1.0, %v1675
    %v1677 = vrcp.pop %v1646
    %v1678 = vmul.f32 1.0, %v1677
    %vm1679 = vcmask 7168
    %1680 = vst.msk [vmem:[%s17] sm:$0xff] %vm1679, %v1648
    %1681 = vst.msk [vmem:[%s17 + $0x8] sm:$0xff] %vm1679, %v1650
    %1682 = vst.msk [vmem:[%s17 + $0x10] sm:$0xff] %vm1679, %v1652
    %1683 = vst.msk [vmem:[%s17 + $0x18] sm:$0xff] %vm1679, %v1654
    %1684 = vst.msk [vmem:[%s17 + $0x20] sm:$0xff] %vm1679, %v1656
    %1685 = vst.msk [vmem:[%s17 + $0x28] sm:$0xff] %vm1679, %v1658
    %1686 = vst.msk [vmem:[%s17 + $0x30] sm:$0xff] %vm1679, %v1660
    %1687 = vst.msk [vmem:[%s17 + $0x38] sm:$0xff] %vm1679, %v1662
    %1688 = vst.msk [vmem:[%s17 + $0x40] sm:$0xff] %vm1679, %v1664
    %1689 = vst.msk [vmem:[%s17 + $0x48] sm:$0xff] %vm1679, %v1666
    %1690 = vst.msk [vmem:[%s17 + $0x50] sm:$0xff] %vm1679, %v1668
    %1691 = vst.msk [vmem:[%s17 + $0x58] sm:$0xff] %vm1679, %v1670
    %1692 = vst.msk [vmem:[%s17 + $0x60] sm:$0xff] %vm1679, %v1672
    %1693 = vst.msk [vmem:[%s17 + $0x68] sm:$0xff] %vm1679, %v1674
    %1694 = vst.msk [vmem:[%s17 + $0x70] sm:$0xff] %vm1679, %v1676
    %1695 = vst.msk [vmem:[%s17 + $0x78] sm:$0xff] %vm1679, %v1678
    %v1696 = vsub.f32 %v1648, 1.0
    %v1697 = vsub.f32 %v1650, 1.0
    %v1698 = vsub.f32 %v1652, 1.0
    %v1699 = vsub.f32 %v1654, 1.0
    %v1700 = vsub.f32 %v1656, 1.0
    %v1701 = vsub.f32 %v1658, 1.0
    %v1702 = vsub.f32 %v1660, 1.0
    %v1703 = vsub.f32 %v1662, 1.0
    %v1704 = vsub.f32 %v1664, 1.0
    %v1705 = vsub.f32 %v1666, 1.0
    %v1706 = vsub.f32 %v1668, 1.0
    %v1707 = vsub.f32 %v1670, 1.0
    %v1708 = vsub.f32 %v1672, 1.0
    %v1709 = vsub.f32 %v1674, 1.0
    %v1710 = vsub.f32 %v1676, 1.0
    %v1711 = vsub.f32 %v1678, 1.0
    %v1712 = vmul.f32 %v1696, %v1696
    %v1713 = vmul.f32 %v1697, %v1697
    %v1714 = vmul.f32 %v1698, %v1698
    %v1715 = vmul.f32 %v1699, %v1699
    %v1716 = vmul.f32 %v1700, %v1700
    %v1717 = vmul.f32 %v1701, %v1701
    %v1718 = vmul.f32 %v1702, %v1702
    %v1719 = vmul.f32 %v1703, %v1703
    %v1720 = vmul.f32 %v1704, %v1704
    %v1721 = vmul.f32 %v1705, %v1705
    %v1722 = vmul.f32 %v1706, %v1706
    %v1723 = vmul.f32 %v1707, %v1707
    %v1724 = vmul.f32 %v1708, %v1708
    %v1725 = vmul.f32 %v1709, %v1709
    %v1726 = vmul.f32 %v1710, %v1710
    %v1727 = vmul.f32 %v1711, %v1711
    %v1728 = vsel %vm1679, %v1712, 0.0
    %v1729 = vsel %vm1679, %v1713, 0.0
    %v1730 = vadd.f32 %v1728, %v1729
    %v1731 = vsel %vm1679, %v1714, 0.0
    %v1732 = vadd.f32 %v1730, %v1731
    %v1733 = vsel %vm1679, %v1715, 0.0
    %v1734 = vadd.f32 %v1732, %v1733
    %v1735 = vsel %vm1679, %v1716, 0.0
    %v1736 = vadd.f32 %v1734, %v1735
    %v1737 = vsel %vm1679, %v1717, 0.0
    %v1738 = vadd.f32 %v1736, %v1737
    %v1739 = vsel %vm1679, %v1718, 0.0
    %v1740 = vadd.f32 %v1738, %v1739
    %v1741 = vsel %vm1679, %v1719, 0.0
    %v1742 = vadd.f32 %v1740, %v1741
    %v1743 = vsel %vm1679, %v1720, 0.0
    %v1744 = vadd.f32 %v1742, %v1743
    %v1745 = vsel %vm1679, %v1721, 0.0
    %v1746 = vadd.f32 %v1744, %v1745
    %v1747 = vsel %vm1679, %v1722, 0.0
    %v1748 = vadd.f32 %v1746, %v1747
    %v1749 = vsel %vm1679, %v1723, 0.0
    %v1750 = vadd.f32 %v1748, %v1749
    %v1751 = vsel %vm1679, %v1724, 0.0
    %v1752 = vadd.f32 %v1750, %v1751
    %v1753 = vsel %vm1679, %v1725, 0.0
    %v1754 = vadd.f32 %v1752, %v1753
    %v1755 = vsel %vm1679, %v1726, 0.0
    %v1756 = vadd.f32 %v1754, %v1755
    %v1757 = vsel %vm1679, %v1727, 0.0
    %v1758 = vadd.f32 %v1756, %v1757
    %1759 = vadd.xlane.f32.xlu0 %v1758
    %v1760 = vpop.xlane.xlu0 %1759
    %v1761 = vrot.slane %v1760, 4
    %v1762 = vadd.f32 %v1760, %v1761
    %v1763 = vrot.slane %v1762, 2
    %v1764 = vadd.f32 %v1762, %v1763
    %v1765 = vrot.slane %v1764, 1
    %v1766 = vadd.f32 %v1764, %v1765
    %s1767 = vtos %v1766
    %v1768 = vstv %s1767
    %v1769 = vrcp.pop 128.0
    %v1770 = vmul.f32 %v1768, %v1769
    %vm1771 = vcmask 0
    %1772 = vst.msk [vmem:[#allocation3] sm:$0x1] %vm1771, %v1770
    // Predicated region
    $region70: #{adaptor_forward.1} parent=1 // pred_check
      _
    $region71: #{adaptor_forward.1} parent=1 // pred_check_branch
      %1774 = sbr.rel (0) target = $region73
    $region72: #{adaptor_forward.1} parent=1 // pred_region
      _
    $region73: #{adaptor_forward.1} parent=1 // pred_fallthru
      _
    // Predicated region
    $region74: #{adaptor_forward.1} parent=1 // pred_check
      _
    $region75: #{adaptor_forward.1} parent=1 // pred_check_branch
      %1776 = sbr.rel (0) target = $region77
    $region76: #{adaptor_forward.1} parent=1 // pred_region
      %s1778 = ssub.s32 16, 16
      %1779 = vsyncadd [#allocation4], %s1778
      %s1781 = sshll.u32 [#allocation3], 4
      %s1782 = int_to_ptr.vmem [resolvable:$true] %s1781
      %1784 = dma.vmem_to_hbm [thread:$0]  %s1782, 16, %s18, [#allocation4]
    $region77: #{adaptor_forward.1} parent=1 // pred_fallthru
      _
    // Predicated region
    $region78: #{adaptor_forward.1} parent=1 // pred_check
      _
    $region79: #{adaptor_forward.1} parent=1 // pred_check_branch
      %1786 = sbr.rel (0) target = $region81
    $region80: #{adaptor_forward.1} parent=1 // pred_region
      _
    $region81: #{adaptor_forward.1} parent=1 // pred_fallthru
      _
    // Predicated region
    $region82: #{adaptor_forward.1} parent=1 // pred_check
      _
    $region83: #{adaptor_forward.1} parent=1 // pred_check_branch
      %1788 = sbr.rel (0) target = $region85
    $region84: #{adaptor_forward.1} parent=1 // pred_region
      %1789 = dma.done [#allocation4], 16
    $region85: #{adaptor_forward.1} parent=1 // pred_fallthru
      _
    %1790 = vsyncpa [#allocation4], 1

</llo_original>
